<compile_context>
chip_gen: v6e
topology: v6e:2x2x1
jax: 0.10.0
libtpu: 0.0.40
codegen_flags: <defaults>
</compile_context>

<pallas_src>
import math

import jax
import jax.numpy as jnp
from jax import lax
from jax.experimental import pallas as pl
from jax.experimental.pallas import tpu as pltpu


# --------------------------- Pallas kernel (hot path) ---------------------------
def _pointconv_kernel(nbr_ref, cterm_ref, t_ref, w2_ref, b2_ref, out_ref):
    tm, K = nbr_ref.shape
    N, H = t_ref.shape
    F_out = w2_ref.shape[1]

    nbr = nbr_ref[...]                                                    # (tm, K) int32

    # Gather T rows for every (center, neighbor-slot) edge with a one-hot matmul on the MXU.
    # TODO(synk): for N too large to keep the node table VMEM-resident, switch to a
    # scalar-prefetch + DMA row gather instead of the one-hot matmul.
    onehot = (nbr[:, :, None] ==
              lax.broadcasted_iota(jnp.int32, (tm, K, N), 2)).astype(jnp.float32)
    onehot = onehot.reshape(tm * K, N)            # layout-free merge (K is a multiple of 8)
    t_j = jnp.dot(onehot, t_ref[...], preferred_element_type=jnp.float32)   # (tm*K, H)

    # Layer 1 (algebraically folded):  h = relu(T[j] - (pos_i @ W1_pos - b1))
    h = jnp.maximum(t_j.reshape(tm, K, H) - cterm_ref[...][:, None, :], 0.0)

    # Layer 2:  o = relu(h @ W2 + b2)  as one flat 2-D matmul over all tm*K edges.
    o = jnp.dot(h.reshape(tm * K, H), w2_ref[...],
                preferred_element_type=jnp.float32) + b2_ref[...]
    o = jnp.maximum(o, 0.0)                                               # (tm*K, F_out)

    # Max aggregation over neighbor slots (invalid slots alias the always-valid self edge).
    out = jnp.max(o.reshape(tm, K, F_out), axis=1)                        # (tm, F_out)

    # Lane-dense store: output laid out (F_out, M_pad) so the minor dim is tm (128 at scale).
    out_ref[...] = out.T


def _round_up(a, b):
    return (a + b - 1) // b * b


def pointconv_gather_mlp_max(nbr, cterm, t_table, w2, b2, *, tm=128):
    """nbr: (M, K) int32 neighbor indices into the node table (invalid slots = self index).
    cterm: (M, H) per-center layer-1 term.  t_table: (N, H) node-level layer-1 projection.
    Returns (M, F_out) float32."""
    M, K = nbr.shape
    N, H = t_table.shape
    F_out = w2.shape[1]

    # tm = 128..512 at realistic M (sweep); clamp for tiny problems, keep it a multiple of 8.
    # (On v7x keep M_pad // tm >= 8 so both TensorCores get work; VMEM use here is small.)
    tm = _round_up(min(tm, _round_up(M, 8)), 8)
    M_pad = _round_up(M, tm)
    if M_pad != M:
        # Padded centers gather row 0 and are sliced off below.
        nbr = jnp.pad(nbr, ((0, M_pad - M), (0, 0)))
        cterm = jnp.pad(cterm, ((0, M_pad - M), (0, 0)))

    out_t = pl.pallas_call(
        _pointconv_kernel,
        out_shape=jax.ShapeDtypeStruct((F_out, M_pad), jnp.float32),
        grid=(M_pad // tm,),
        in_specs=[
            pl.BlockSpec((tm, K), lambda i: (i, 0)),        # neighbor index tile (streamed)
            pl.BlockSpec((tm, H), lambda i: (i, 0)),        # per-center term (streamed)
            pl.BlockSpec((N, H), lambda i: (0, 0)),         # node table T (resident)
            pl.BlockSpec((H, F_out), lambda i: (0, 0)),     # W2 (resident)
            pl.BlockSpec((1, F_out), lambda i: (0, 0)),     # b2 (resident)
        ],
        out_specs=pl.BlockSpec((F_out, tm), lambda i: (0, i)),  # lane-dense stores
        compiler_params=pltpu.CompilerParams(dimension_semantics=("parallel",)),
    )(nbr.astype(jnp.int32), cterm.astype(jnp.float32), t_table.astype(jnp.float32),
      w2.astype(jnp.float32), b2.reshape(1, F_out).astype(jnp.float32))

    return out_t[:, :M].T                                                 # (M, F_out)


# ---------------- plain-JAX glue (FPS / radius search — data dependent) ----------------
def fps_equal_batches(pos, B, n_per, ratio):
    """Farthest point sampling, deterministic start at local index 0 of each batch segment.
    Assumes contiguous, equal-sized batches (as constructed in __main__)."""
    m = int(math.ceil(ratio * n_per))
    pos_b = pos.reshape(B, n_per, pos.shape[-1])

    def one(pb):
        def body(i, state):
            sel, dmin = state
            last = sel[i - 1]
            d = jnp.sum((pb - pb[last]) ** 2, axis=-1)
            dmin = jnp.minimum(dmin, d)
            sel = sel.at[i].set(jnp.argmax(dmin).astype(jnp.int32))
            return sel, dmin

        sel0 = jnp.zeros((m,), jnp.int32)
        dmin0 = jnp.full((n_per,), jnp.inf, jnp.float32)
        sel, _ = jax.lax.fori_loop(1, m, body, (sel0, dmin0))
        return sel

    local = jax.vmap(one)(pos_b)                                          # (B, m)
    offsets = (jnp.arange(B, dtype=jnp.int32) * n_per)[:, None]
    return (local + offsets).reshape(-1)                                  # (B*m,)


def neighbor_search(pos, batch, pos_c, batch_c, r, max_nn):
    """For each center, up to max_nn same-batch points within radius r, nearest-first.
    Returns (order, valid): (M, K) int32 indices and (M, K) bool validity."""
    N = pos.shape[0]
    K = min(max_nn, N)
    d2 = jnp.sum((pos_c[:, None, :] - pos[None, :, :]) ** 2, axis=-1)     # (M, N)
    ok = (d2 <= r * r) & (batch_c[:, None] == batch[None, :])
    d2m = jnp.where(ok, d2, jnp.inf)
    order = jnp.argsort(d2m, axis=1)[:, :K].astype(jnp.int32)             # (M, K)
    valid = jnp.take_along_axis(d2m, order, axis=1) < jnp.inf
    return order, valid


# --------------------------------- SAModule forward ---------------------------------
def sa_module_forward(x, pos, batch, params, *, B, n_per, ratio, r, max_nn=64, tm=128):
    w1, b1, w2, b2 = params
    idx = fps_equal_batches(pos, B, n_per, ratio)                 # fps(pos, batch, ratio)
    pos_c, batch_c = pos[idx], batch[idx]
    order, valid = neighbor_search(pos, batch, pos_c, batch_c, r, max_nn)
    # Invalid slots -> the center's own index: the self edge is always valid, and duplicating
    # it never changes the max, so no mask is needed downstream.
    nbr = jnp.where(valid, order, idx[:, None]).astype(jnp.int32)

    # Fold layer 1 of the edge MLP over the concat/subtract (no K-fold duplication in HBM):
    #   h_edge(i, j) = relu([x_j | pos_j - pos_i] @ W1 + b1) = relu(T[j] - cterm[i])
    C = x.shape[1]
    t_table = jnp.concatenate([x, pos], axis=1).astype(jnp.float32) @ w1  # (N, H)
    cterm = pos_c @ w1[C:, :] - b1[None, :]                               # (M, H)

    x_out = pointconv_gather_mlp_max(nbr, cterm, t_table, w2, b2, tm=tm)
    return x_out, pos_c, batch_c


def sa_module_reference(x, pos, batch, params, *, B, n_per, ratio, r, max_nn=64):
    """Pure-JAX reference mirroring the PyTorch module (explicit edge features + mask)."""
    w1, b1, w2, b2 = params
    idx = fps_equal_batches(pos, B, n_per, ratio)
    pos_c, batch_c = pos[idx], batch[idx]
    order, valid = neighbor_search(pos, batch, pos_c, batch_c, r, max_nn)
    x_j = x[order]                                                        # (M, K, C)
    rel = pos[order] - pos_c[:, None, :]                                  # (M, K, 3)
    feats = jnp.concatenate([x_j, rel], axis=-1).astype(jnp.float32)      # (M, K, C+3)
    h = jnp.maximum(feats @ w1 + b1, 0.0)
    o = jnp.maximum(h @ w2 + b2, 0.0)
    o = jnp.where(valid[..., None], o, -jnp.inf)
    return jnp.max(o, axis=1), pos_c, batch_c


# --------------------------------------- main ---------------------------------------
if __name__ == "__main__":
    B, n_per, C = 2, 16, 4        # 2 batches of 16 points, 4 input feature channels
    ratio, r = 0.5, 0.75          # SAModule(ratio, r, nn)
    H, F_out = 32, 32             # nn = MLP([C + 3, 32, 32])  (Linear+ReLU, Linear+ReLU)
    F_in = C + 3

    key = jax.random.PRNGKey(0)
    k_pos, k_x, k_w1, k_b1, k_w2, k_b2 = jax.random.split(key, 6)

    pos = jax.random.uniform(k_pos, (B * n_per, 3), dtype=jnp.float32)
    x = jax.random.normal(k_x, (B * n_per, C), dtype=jnp.float32)
    batch = jnp.repeat(jnp.arange(B, dtype=jnp.int32), n_per)

    # deterministic synthetic MLP parameters
    w1 = jax.random.normal(k_w1, (F_in, H), jnp.float32) * (1.0 / math.sqrt(F_in))
    b1 = jax.random.normal(k_b1, (H,), jnp.float32) * 0.01
    w2 = jax.random.normal(k_w2, (H, F_out), jnp.float32) * (1.0 / math.sqrt(H))
    b2 = jax.random.normal(k_b2, (F_out,), jnp.float32) * 0.01
    params = (w1, b1, w2, b2)

    x_out, pos_out, batch_out = sa_module_forward(
        x, pos, batch, params, B=B, n_per=n_per, ratio=ratio, r=r)
    jax.block_until_ready((x_out, pos_out, batch_out))

    M = B * math.ceil(ratio * n_per)
    assert x_out.shape == (M, F_out)
    assert pos_out.shape == (M, 3)
    assert batch_out.shape == (M,)

    # Correctness check against the pure-JAX reference.  Tolerance covers TPU default
    # (bf16-pass) f32 matmul precision and the re-associated layer-1 algebra in both paths.
    x_ref, pos_ref, batch_ref = sa_module_reference(
        x, pos, batch, params, B=B, n_per=n_per, ratio=ratio, r=r)
    jax.block_until_ready((x_ref, pos_ref, batch_ref))
    assert jnp.allclose(x_out, x_ref, atol=3e-2, rtol=3e-2)
    assert jnp.array_equal(pos_out, pos_ref)
    assert jnp.array_equal(batch_out, batch_ref)

    print("KERNEL_OK")
</pallas_src>

<mosaic_0001>
module attributes {stable_mosaic.version = 11 : i64} {
  func.func @_pointconv_kernel(%arg0: i32, %arg1: memref<16x32xi32, #tpu.memory_space<vmem>>, %arg2: memref<16x32xf32, #tpu.memory_space<vmem>>, %arg3: memref<32x32xf32, #tpu.memory_space<vmem>>, %arg4: memref<32x32xf32, #tpu.memory_space<vmem>>, %arg5: memref<1x32xf32, #tpu.memory_space<vmem>>, %arg6: memref<32x16xf32, #tpu.memory_space<vmem>>) attributes {dimension_semantics = [#tpu.dimension_semantics<parallel>], iteration_bounds = array<i64: 1>, scalar_prefetch = 0 : i64, scratch_operands = 0 : i64, tpu.core_type = #tpu.core_type<tc>, window_params = [{transform_indices = @transform_0, window_bounds = array<i64: 16, 32>}, {transform_indices = @transform_1, window_bounds = array<i64: 16, 32>}, {pipeline_mode = #tpu.pipeline_mode<synchronous>, transform_indices = @transform_2, window_bounds = array<i64: 32, 32>}, {pipeline_mode = #tpu.pipeline_mode<synchronous>, transform_indices = @transform_3, window_bounds = array<i64: 32, 32>}, {pipeline_mode = #tpu.pipeline_mode<synchronous>, transform_indices = @transform_4, window_bounds = array<i64: 1, 32>}, {transform_indices = @transform_5, window_bounds = array<i64: 32, 16>}]} {
    %c0 = arith.constant 0 : index
    %c0_0 = arith.constant 0 : index
    %0 = vector.load %arg1[%c0, %c0_0] : memref<16x32xi32, #tpu.memory_space<vmem>>, vector<16x32xi32>
    %1 = vector.shape_cast %0 : vector<16x32xi32> to vector<16x32x1xi32>
    %2 = tpu.iota {dimensions = array<i32: 2>} : vector<16x32x32xi32>
    %3 = vector.broadcast %1 : vector<16x32x1xi32> to vector<16x32x32xi32>
    %4 = arith.cmpi eq, %3, %2 : vector<16x32x32xi32>
    %5 = arith.extui %4 : vector<16x32x32xi1> to vector<16x32x32xi32>
    %6 = arith.sitofp %5 : vector<16x32x32xi32> to vector<16x32x32xf32>
    %7 = vector.shape_cast %6 : vector<16x32x32xf32> to vector<512x32xf32>
    %c0_1 = arith.constant 0 : index
    %c0_2 = arith.constant 0 : index
    %8 = vector.load %arg3[%c0_1, %c0_2] : memref<32x32xf32, #tpu.memory_space<vmem>>, vector<32x32xf32>
    %cst = arith.constant dense<0.000000e+00> : vector<512x32xf32>
    %9 = tpu.matmul %7, %8, %cst {dimension_numbers = #tpu.dot_dimension_numbers<[1], [0], [0], [1], [0, 0, 1, 1], [], []>} : vector<512x32xf32>, vector<32x32xf32>, vector<512x32xf32> -> vector<512x32xf32>
    %10 = vector.shape_cast %9 : vector<512x32xf32> to vector<16x32x32xf32>
    %c0_3 = arith.constant 0 : index
    %c0_4 = arith.constant 0 : index
    %11 = vector.load %arg2[%c0_3, %c0_4] : memref<16x32xf32, #tpu.memory_space<vmem>>, vector<16x32xf32>
    %12 = vector.shape_cast %11 : vector<16x32xf32> to vector<16x1x32xf32>
    %13 = vector.broadcast %12 : vector<16x1x32xf32> to vector<16x32x32xf32>
    %14 = arith.subf %10, %13 : vector<16x32x32xf32>
    %cst_5 = arith.constant 0.000000e+00 : f32
    %15 = vector.broadcast %cst_5 : f32 to vector<16x32x32xf32>
    %16 = arith.maximumf %14, %15 : vector<16x32x32xf32>
    %17 = vector.shape_cast %16 : vector<16x32x32xf32> to vector<512x32xf32>
    %c0_6 = arith.constant 0 : index
    %c0_7 = arith.constant 0 : index
    %18 = vector.load %arg4[%c0_6, %c0_7] : memref<32x32xf32, #tpu.memory_space<vmem>>, vector<32x32xf32>
    %cst_8 = arith.constant dense<0.000000e+00> : vector<512x32xf32>
    %19 = tpu.matmul %17, %18, %cst_8 {dimension_numbers = #tpu.dot_dimension_numbers<[1], [0], [0], [1], [0, 0, 1, 1], [], []>} : vector<512x32xf32>, vector<32x32xf32>, vector<512x32xf32> -> vector<512x32xf32>
    %c0_9 = arith.constant 0 : index
    %c0_10 = arith.constant 0 : index
    %20 = vector.load %arg5[%c0_9, %c0_10] : memref<1x32xf32, #tpu.memory_space<vmem>>, vector<1x32xf32>
    %21 = vector.broadcast %20 : vector<1x32xf32> to vector<512x32xf32>
    %22 = arith.addf %19, %21 : vector<512x32xf32>
    %cst_11 = arith.constant 0.000000e+00 : f32
    %23 = vector.broadcast %cst_11 : f32 to vector<512x32xf32>
    %24 = arith.maximumf %22, %23 : vector<512x32xf32>
    %25 = vector.shape_cast %24 : vector<512x32xf32> to vector<16x32x32xf32>
    %cst_12 = arith.constant dense<0xFF800000> : vector<16x32xf32>
    %26 = vector.multi_reduction <maximumf>, %25, %cst_12 [1] : vector<16x32x32xf32> to vector<16x32xf32>
    %27 = tpu.transpose %26, [1, 0] : vector<16x32xf32> -> vector<32x16xf32>
    %c0_13 = arith.constant 0 : index
    %c0_14 = arith.constant 0 : index
    %28 = vector.load %arg6[%c0_13, %c0_14] : memref<32x16xf32, #tpu.memory_space<vmem>>, vector<32x16xf32>
    tpu.vector_store %arg6[%c0_13, %c0_14], %27 {strides = array<i32>} : memref<32x16xf32, #tpu.memory_space<vmem>>, vector<32x16xf32>,
    return
  }
  func.func @transform_0(%arg0: i32) -> (i32, i32) {
    %c0_i32 = arith.constant 0 : i32
    %c0_i32_0 = arith.constant 0 : i32
    return %arg0, %c0_i32 : i32, i32
  }
  func.func @transform_1(%arg0: i32) -> (i32, i32) {
    %c0_i32 = arith.constant 0 : i32
    %c0_i32_0 = arith.constant 0 : i32
    return %arg0, %c0_i32 : i32, i32
  }
  func.func @transform_2(%arg0: i32) -> (i32, i32) {
    %c0_i32 = arith.constant 0 : i32
    %c0_i32_0 = arith.constant 0 : i32
    %c0_i32_1 = arith.constant 0 : i32
    return %c0_i32, %c0_i32_0 : i32, i32
  }
  func.func @transform_3(%arg0: i32) -> (i32, i32) {
    %c0_i32 = arith.constant 0 : i32
    %c0_i32_0 = arith.constant 0 : i32
    %c0_i32_1 = arith.constant 0 : i32
    return %c0_i32, %c0_i32_0 : i32, i32
  }
  func.func @transform_4(%arg0: i32) -> (i32, i32) {
    %c0_i32 = arith.constant 0 : i32
    %c0_i32_0 = arith.constant 0 : i32
    %c0_i32_1 = arith.constant 0 : i32
    return %c0_i32, %c0_i32_0 : i32, i32
  }
  func.func @transform_5(%arg0: i32) -> (i32, i32) {
    %c0_i32 = arith.constant 0 : i32
    %c0_i32_0 = arith.constant 0 : i32
    return %c0_i32, %arg0 : i32, i32
  }
}

</mosaic_0001>

<llo_original>
// kernel: tpu_custom_call.1
$region0: #{tpu_custom_call.1}
  #allocation0 [shape = 'u32[]', space=smem, size = 0x4, offset = 0x4, fixed_abs, tag = 'smem constant byte address 0x4 - core index']
  #allocation1 [shape = 'u32[144,128]{1,0:T(1,128)}', space=vmem, size = 0x12000, scoped, tag = 'internal scratch']
  %s0 = inlined_call_operand.hbm [shape: s32[16,32], index: 0, kind: input, shape index: {}]
  %s1 = inlined_call_operand.hbm [shape: f32[16,32], index: 1, kind: input, shape index: {}]
  %s2 = inlined_call_operand.hbm [shape: f32[32,32], index: 2, kind: input, shape index: {}]
  %s3 = inlined_call_operand.hbm [shape: f32[32,32], index: 3, kind: input, shape index: {}]
  %s4 = inlined_call_operand.vmem [shape: f32[1,32], index: 4, kind: input, shape index: {}]
  %s5 = inlined_call_operand.vmem [shape: f32[32,16], index: 5, kind: output, shape index: {}]
  %s6 = sld [smem:[#allocation0]]
  $region46: #{tpu_custom_call.1} parent=0
    _
  %s8 = ssub.s32 1, %s6
  %s9 = scalar_select 0, %s8, %s6
  $region1: #{tpu_custom_call.1} parent=0
    #allocation2 [shape = 'u8[8192]{0}', space=vmem, size = 0x2000, scoped, tag = 'input window, operand 0, single buffered']
    #allocation3 [shape = 's32[1]{0}', space=sflag, size = 0x4, scoped, tag = 'scoped memory for tpu_custom_call.1']
    #allocation4 [shape = 'u8[8192]{0}', space=vmem, size = 0x2000, scoped, tag = 'input window, operand 1, single buffered']
    #allocation5 [shape = 's32[1]{0}', space=sflag, size = 0x4, scoped, tag = 'scoped memory for tpu_custom_call.1']
    #allocation6 [shape = 'u8[16384]{0}', space=vmem, size = 0x4000, scoped, tag = 'input window, operand 2, single buffered']
    #allocation7 [shape = 'u8[16384]{0}', space=vmem, size = 0x4000, scoped, tag = 'input window, operand 3, single buffered']
    #allocation8 [shape = 's32[1]{0}', space=sflag, size = 0x4, scoped, tag = 'scoped memory for tpu_custom_call.1']
    %10 = vsyncpa [#allocation3], 0
    %11 = vsyncpa [#allocation5], 0
    %12 = vsyncpa [#allocation8], 0
    // Predicated region
    $region2: #{tpu_custom_call.1} parent=1 // pred_check
      _
    $region3: #{tpu_custom_call.1} parent=1 // pred_check_branch
      %14 = sbr.rel (0) target = $region5
    $region4: #{tpu_custom_call.1} parent=1 // pred_region
      %s16 = ssub.s32 256, 256
      %17 = vsyncadd [#allocation3], %s16
      %s18 = sshll.u32 [#allocation2], 4
      %s19 = int_to_ptr.vmem [resolvable:$true] %s18
      %24 = dma.hbm_to_vmem [thread:$0]  %s0, 256, %s19, [#allocation3], 128, 128, 8
    $region5: #{tpu_custom_call.1} parent=1 // pred_fallthru
      _
    // Predicated region
    $region6: #{tpu_custom_call.1} parent=1 // pred_check
      _
    $region7: #{tpu_custom_call.1} parent=1 // pred_check_branch
      %26 = sbr.rel (0) target = $region9
    $region8: #{tpu_custom_call.1} parent=1 // pred_region
      %s28 = ssub.s32 256, 256
      %29 = vsyncadd [#allocation5], %s28
      %s30 = sshll.u32 [#allocation4], 4
      %s31 = int_to_ptr.vmem [resolvable:$true] %s30
      %36 = dma.hbm_to_vmem [thread:$0]  %s1, 256, %s31, [#allocation5], 128, 128, 8
    $region9: #{tpu_custom_call.1} parent=1 // pred_fallthru
      _
    // Predicated region
    $region10: #{tpu_custom_call.1} parent=1 // pred_check
      _
    $region11: #{tpu_custom_call.1} parent=1 // pred_check_branch
      %38 = sbr.rel (0) target = $region13
    $region12: #{tpu_custom_call.1} parent=1 // pred_region
      %s40 = ssub.s32 512, 512
      %41 = vsyncadd [#allocation5], %s40
      %s42 = sshll.u32 [#allocation6], 4
      %s43 = int_to_ptr.vmem [resolvable:$true] %s42
      %48 = dma.hbm_to_vmem [thread:$0]  %s2, 512, %s43, [#allocation5], 128, 128, 8
    $region13: #{tpu_custom_call.1} parent=1 // pred_fallthru
      _
    // Predicated region
    $region14: #{tpu_custom_call.1} parent=1 // pred_check
      _
    $region15: #{tpu_custom_call.1} parent=1 // pred_check_branch
      %50 = sbr.rel (0) target = $region17
    $region16: #{tpu_custom_call.1} parent=1 // pred_region
      %s52 = ssub.s32 512, 512
      %53 = vsyncadd [#allocation8], %s52
      %s54 = sshll.u32 [#allocation7], 4
      %s55 = int_to_ptr.vmem [resolvable:$true] %s54
      %60 = dma.hbm_to_vmem [thread:$0]  %s3, 512, %s55, [#allocation8], 128, 128, 8
    $region17: #{tpu_custom_call.1} parent=1 // pred_fallthru
      _
    // Predicated region
    $region18: #{tpu_custom_call.1} parent=1 // pred_check
      _
    $region19: #{tpu_custom_call.1} parent=1 // pred_check_branch
      %62 = sbr.rel (0) target = $region21
    $region20: #{tpu_custom_call.1} parent=1 // pred_region
      _
    $region21: #{tpu_custom_call.1} parent=1 // pred_fallthru
      _
    // Predicated region
    $region22: #{tpu_custom_call.1} parent=1 // pred_check
      _
    $region23: #{tpu_custom_call.1} parent=1 // pred_check_branch
      %64 = sbr.rel (0) target = $region25
    $region24: #{tpu_custom_call.1} parent=1 // pred_region
      %65 = dma.done [#allocation3], 256
    $region25: #{tpu_custom_call.1} parent=1 // pred_fallthru
      _
    // Predicated region
    $region26: #{tpu_custom_call.1} parent=1 // pred_check
      _
    $region27: #{tpu_custom_call.1} parent=1 // pred_check_branch
      %67 = sbr.rel (0) target = $region29
    $region28: #{tpu_custom_call.1} parent=1 // pred_region
      %68 = dma.done [#allocation5], 256
    $region29: #{tpu_custom_call.1} parent=1 // pred_fallthru
      _
    // Predicated region
    $region30: #{tpu_custom_call.1} parent=1 // pred_check
      _
    $region31: #{tpu_custom_call.1} parent=1 // pred_check_branch
      %70 = sbr.rel (0) target = $region33
    $region32: #{tpu_custom_call.1} parent=1 // pred_region
      %71 = dma.done [#allocation5], 512
    $region33: #{tpu_custom_call.1} parent=1 // pred_fallthru
      _
    // Predicated region
    $region34: #{tpu_custom_call.1} parent=1 // pred_check
      _
    $region35: #{tpu_custom_call.1} parent=1 // pred_check_branch
      %73 = sbr.rel (0) target = $region37
    $region36: #{tpu_custom_call.1} parent=1 // pred_region
      %74 = dma.done [#allocation8], 512
    $region37: #{tpu_custom_call.1} parent=1 // pred_fallthru
      _
    %v75 = vld [vmem:[#allocation2] sm:$0xff]
    %v76 = vld [vmem:[#allocation2 + $0x8] sm:$0xff]
    %v77 = vlaneseq
    %v78 = vshrl.u32 %v77, 7
    %v79 = vsub.s32 0, %v78
    %v80 = vrot.slane %v75, %v79
    %82 = vbcast.lane.b32.xlu0 %v80, 256
    %v83 = vpop.permute.xlu0 %82
    %s85 = sor.u32 256, 8
    %86 = vbcast.lane.b32.xlu0 %v80, %s85
    %v87 = vpop.permute.xlu0 %86
    %s89 = sor.u32 256, 16
    %90 = vbcast.lane.b32.xlu0 %v80, %s89
    %v91 = vpop.permute.xlu0 %90
    %s93 = sor.u32 256, 24
    %94 = vbcast.lane.b32.xlu0 %v80, %s93
    %v95 = vpop.permute.xlu0 %94
    %v96 = vlaneseq
    %v97 = vshrl.u32 %v96, 7
    %v98 = vsub.s32 1, %v97
    %v99 = vrot.slane %v75, %v98
    %101 = vbcast.lane.b32.xlu0 %v99, 256
    %v102 = vpop.permute.xlu0 %101
    %s104 = sor.u32 256, 8
    %105 = vbcast.lane.b32.xlu0 %v99, %s104
    %v106 = vpop.permute.xlu0 %105
    %s108 = sor.u32 256, 16
    %109 = vbcast.lane.b32.xlu0 %v99, %s108
    %v110 = vpop.permute.xlu0 %109
    %s112 = sor.u32 256, 24
    %113 = vbcast.lane.b32.xlu0 %v99, %s112
    %v114 = vpop.permute.xlu0 %113
    %v115 = vlaneseq
    %v116 = vshrl.u32 %v115, 7
    %v117 = vsub.s32 2, %v116
    %v118 = vrot.slane %v75, %v117
    %120 = vbcast.lane.b32.xlu0 %v118, 256
    %v121 = vpop.permute.xlu0 %120
    %s123 = sor.u32 256, 8
    %124 = vbcast.lane.b32.xlu0 %v118, %s123
    %v125 = vpop.permute.xlu0 %124
    %s127 = sor.u32 256, 16
    %128 = vbcast.lane.b32.xlu0 %v118, %s127
    %v129 = vpop.permute.xlu0 %128
    %s131 = sor.u32 256, 24
    %132 = vbcast.lane.b32.xlu0 %v118, %s131
    %v133 = vpop.permute.xlu0 %132
    %v134 = vlaneseq
    %v135 = vshrl.u32 %v134, 7
    %v136 = vsub.s32 3, %v135
    %v137 = vrot.slane %v75, %v136
    %139 = vbcast.lane.b32.xlu0 %v137, 256
    %v140 = vpop.permute.xlu0 %139
    %s142 = sor.u32 256, 8
    %143 = vbcast.lane.b32.xlu0 %v137, %s142
    %v144 = vpop.permute.xlu0 %143
    %s146 = sor.u32 256, 16
    %147 = vbcast.lane.b32.xlu0 %v137, %s146
    %v148 = vpop.permute.xlu0 %147
    %s150 = sor.u32 256, 24
    %151 = vbcast.lane.b32.xlu0 %v137, %s150
    %v152 = vpop.permute.xlu0 %151
    %v153 = vlaneseq
    %v154 = vshrl.u32 %v153, 7
    %v155 = vsub.s32 4, %v154
    %v156 = vrot.slane %v75, %v155
    %158 = vbcast.lane.b32.xlu0 %v156, 256
    %v159 = vpop.permute.xlu0 %158
    %s161 = sor.u32 256, 8
    %162 = vbcast.lane.b32.xlu0 %v156, %s161
    %v163 = vpop.permute.xlu0 %162
    %s165 = sor.u32 256, 16
    %166 = vbcast.lane.b32.xlu0 %v156, %s165
    %v167 = vpop.permute.xlu0 %166
    %s169 = sor.u32 256, 24
    %170 = vbcast.lane.b32.xlu0 %v156, %s169
    %v171 = vpop.permute.xlu0 %170
    %v172 = vlaneseq
    %v173 = vshrl.u32 %v172, 7
    %v174 = vsub.s32 5, %v173
    %v175 = vrot.slane %v75, %v174
    %177 = vbcast.lane.b32.xlu0 %v175, 256
    %v178 = vpop.permute.xlu0 %177
    %s180 = sor.u32 256, 8
    %181 = vbcast.lane.b32.xlu0 %v175, %s180
    %v182 = vpop.permute.xlu0 %181
    %s184 = sor.u32 256, 16
    %185 = vbcast.lane.b32.xlu0 %v175, %s184
    %v186 = vpop.permute.xlu0 %185
    %s188 = sor.u32 256, 24
    %189 = vbcast.lane.b32.xlu0 %v175, %s188
    %v190 = vpop.permute.xlu0 %189
    %v191 = vlaneseq
    %v192 = vshrl.u32 %v191, 7
    %v193 = vsub.s32 6, %v192
    %v194 = vrot.slane %v75, %v193
    %196 = vbcast.lane.b32.xlu0 %v194, 256
    %v197 = vpop.permute.xlu0 %196
    %s199 = sor.u32 256, 8
    %200 = vbcast.lane.b32.xlu0 %v194, %s199
    %v201 = vpop.permute.xlu0 %200
    %s203 = sor.u32 256, 16
    %204 = vbcast.lane.b32.xlu0 %v194, %s203
    %v205 = vpop.permute.xlu0 %204
    %s207 = sor.u32 256, 24
    %208 = vbcast.lane.b32.xlu0 %v194, %s207
    %v209 = vpop.permute.xlu0 %208
    %v210 = vlaneseq
    %v211 = vshrl.u32 %v210, 7
    %v212 = vsub.s32 7, %v211
    %v213 = vrot.slane %v75, %v212
    %215 = vbcast.lane.b32.xlu0 %v213, 256
    %v216 = vpop.permute.xlu0 %215
    %s218 = sor.u32 256, 8
    %219 = vbcast.lane.b32.xlu0 %v213, %s218
    %v220 = vpop.permute.xlu0 %219
    %s222 = sor.u32 256, 16
    %223 = vbcast.lane.b32.xlu0 %v213, %s222
    %v224 = vpop.permute.xlu0 %223
    %s226 = sor.u32 256, 24
    %227 = vbcast.lane.b32.xlu0 %v213, %s226
    %v228 = vpop.permute.xlu0 %227
    %v229 = vlaneseq
    %v230 = vshrl.u32 %v229, 7
    %v231 = vsub.s32 0, %v230
    %v232 = vrot.slane %v76, %v231
    %234 = vbcast.lane.b32.xlu0 %v232, 256
    %v235 = vpop.permute.xlu0 %234
    %s237 = sor.u32 256, 8
    %238 = vbcast.lane.b32.xlu0 %v232, %s237
    %v239 = vpop.permute.xlu0 %238
    %s241 = sor.u32 256, 16
    %242 = vbcast.lane.b32.xlu0 %v232, %s241
    %v243 = vpop.permute.xlu0 %242
    %s245 = sor.u32 256, 24
    %246 = vbcast.lane.b32.xlu0 %v232, %s245
    %v247 = vpop.permute.xlu0 %246
    %v248 = vlaneseq
    %v249 = vshrl.u32 %v248, 7
    %v250 = vsub.s32 1, %v249
    %v251 = vrot.slane %v76, %v250
    %253 = vbcast.lane.b32.xlu0 %v251, 256
    %v254 = vpop.permute.xlu0 %253
    %s256 = sor.u32 256, 8
    %257 = vbcast.lane.b32.xlu0 %v251, %s256
    %v258 = vpop.permute.xlu0 %257
    %s260 = sor.u32 256, 16
    %261 = vbcast.lane.b32.xlu0 %v251, %s260
    %v262 = vpop.permute.xlu0 %261
    %s264 = sor.u32 256, 24
    %265 = vbcast.lane.b32.xlu0 %v251, %s264
    %v266 = vpop.permute.xlu0 %265
    %v267 = vlaneseq
    %v268 = vshrl.u32 %v267, 7
    %v269 = vsub.s32 2, %v268
    %v270 = vrot.slane %v76, %v269
    %272 = vbcast.lane.b32.xlu0 %v270, 256
    %v273 = vpop.permute.xlu0 %272
    %s275 = sor.u32 256, 8
    %276 = vbcast.lane.b32.xlu0 %v270, %s275
    %v277 = vpop.permute.xlu0 %276
    %s279 = sor.u32 256, 16
    %280 = vbcast.lane.b32.xlu0 %v270, %s279
    %v281 = vpop.permute.xlu0 %280
    %s283 = sor.u32 256, 24
    %284 = vbcast.lane.b32.xlu0 %v270, %s283
    %v285 = vpop.permute.xlu0 %284
    %v286 = vlaneseq
    %v287 = vshrl.u32 %v286, 7
    %v288 = vsub.s32 3, %v287
    %v289 = vrot.slane %v76, %v288
    %291 = vbcast.lane.b32.xlu0 %v289, 256
    %v292 = vpop.permute.xlu0 %291
    %s294 = sor.u32 256, 8
    %295 = vbcast.lane.b32.xlu0 %v289, %s294
    %v296 = vpop.permute.xlu0 %295
    %s298 = sor.u32 256, 16
    %299 = vbcast.lane.b32.xlu0 %v289, %s298
    %v300 = vpop.permute.xlu0 %299
    %s302 = sor.u32 256, 24
    %303 = vbcast.lane.b32.xlu0 %v289, %s302
    %v304 = vpop.permute.xlu0 %303
    %v305 = vlaneseq
    %v306 = vshrl.u32 %v305, 7
    %v307 = vsub.s32 4, %v306
    %v308 = vrot.slane %v76, %v307
    %310 = vbcast.lane.b32.xlu0 %v308, 256
    %v311 = vpop.permute.xlu0 %310
    %s313 = sor.u32 256, 8
    %314 = vbcast.lane.b32.xlu0 %v308, %s313
    %v315 = vpop.permute.xlu0 %314
    %s317 = sor.u32 256, 16
    %318 = vbcast.lane.b32.xlu0 %v308, %s317
    %v319 = vpop.permute.xlu0 %318
    %s321 = sor.u32 256, 24
    %322 = vbcast.lane.b32.xlu0 %v308, %s321
    %v323 = vpop.permute.xlu0 %322
    %v324 = vlaneseq
    %v325 = vshrl.u32 %v324, 7
    %v326 = vsub.s32 5, %v325
    %v327 = vrot.slane %v76, %v326
    %329 = vbcast.lane.b32.xlu0 %v327, 256
    %v330 = vpop.permute.xlu0 %329
    %s332 = sor.u32 256, 8
    %333 = vbcast.lane.b32.xlu0 %v327, %s332
    %v334 = vpop.permute.xlu0 %333
    %s336 = sor.u32 256, 16
    %337 = vbcast.lane.b32.xlu0 %v327, %s336
    %v338 = vpop.permute.xlu0 %337
    %s340 = sor.u32 256, 24
    %341 = vbcast.lane.b32.xlu0 %v327, %s340
    %v342 = vpop.permute.xlu0 %341
    %v343 = vlaneseq
    %v344 = vshrl.u32 %v343, 7
    %v345 = vsub.s32 6, %v344
    %v346 = vrot.slane %v76, %v345
    %348 = vbcast.lane.b32.xlu0 %v346, 256
    %v349 = vpop.permute.xlu0 %348
    %s351 = sor.u32 256, 8
    %352 = vbcast.lane.b32.xlu0 %v346, %s351
    %v353 = vpop.permute.xlu0 %352
    %s355 = sor.u32 256, 16
    %356 = vbcast.lane.b32.xlu0 %v346, %s355
    %v357 = vpop.permute.xlu0 %356
    %s359 = sor.u32 256, 24
    %360 = vbcast.lane.b32.xlu0 %v346, %s359
    %v361 = vpop.permute.xlu0 %360
    %v362 = vlaneseq
    %v363 = vshrl.u32 %v362, 7
    %v364 = vsub.s32 7, %v363
    %v365 = vrot.slane %v76, %v364
    %367 = vbcast.lane.b32.xlu0 %v365, 256
    %v368 = vpop.permute.xlu0 %367
    %s370 = sor.u32 256, 8
    %371 = vbcast.lane.b32.xlu0 %v365, %s370
    %v372 = vpop.permute.xlu0 %371
    %s374 = sor.u32 256, 16
    %375 = vbcast.lane.b32.xlu0 %v365, %s374
    %v376 = vpop.permute.xlu0 %375
    %s378 = sor.u32 256, 24
    %379 = vbcast.lane.b32.xlu0 %v365, %s378
    %v380 = vpop.permute.xlu0 %379
    %v381 = vlaneseq
    %v382 = vand.u32 %v381, 127
    %vm383 = vcmp.eq.s32.totalorder %v83, %v382
    %vm384 = vcmp.eq.s32.totalorder %v87, %v382
    %vm385 = vcmp.eq.s32.totalorder %v91, %v382
    %vm386 = vcmp.eq.s32.totalorder %v95, %v382
    %vm387 = vcmp.eq.s32.totalorder %v102, %v382
    %vm388 = vcmp.eq.s32.totalorder %v106, %v382
    %vm389 = vcmp.eq.s32.totalorder %v110, %v382
    %vm390 = vcmp.eq.s32.totalorder %v114, %v382
    %vm391 = vcmp.eq.s32.totalorder %v121, %v382
    %vm392 = vcmp.eq.s32.totalorder %v125, %v382
    %vm393 = vcmp.eq.s32.totalorder %v129, %v382
    %vm394 = vcmp.eq.s32.totalorder %v133, %v382
    %vm395 = vcmp.eq.s32.totalorder %v140, %v382
    %vm396 = vcmp.eq.s32.totalorder %v144, %v382
    %vm397 = vcmp.eq.s32.totalorder %v148, %v382
    %vm398 = vcmp.eq.s32.totalorder %v152, %v382
    %vm399 = vcmp.eq.s32.totalorder %v159, %v382
    %vm400 = vcmp.eq.s32.totalorder %v163, %v382
    %vm401 = vcmp.eq.s32.totalorder %v167, %v382
    %vm402 = vcmp.eq.s32.totalorder %v171, %v382
    %vm403 = vcmp.eq.s32.totalorder %v178, %v382
    %vm404 = vcmp.eq.s32.totalorder %v182, %v382
    %vm405 = vcmp.eq.s32.totalorder %v186, %v382
    %vm406 = vcmp.eq.s32.totalorder %v190, %v382
    %vm407 = vcmp.eq.s32.totalorder %v197, %v382
    %vm408 = vcmp.eq.s32.totalorder %v201, %v382
    %vm409 = vcmp.eq.s32.totalorder %v205, %v382
    %vm410 = vcmp.eq.s32.totalorder %v209, %v382
    %vm411 = vcmp.eq.s32.totalorder %v216, %v382
    %vm412 = vcmp.eq.s32.totalorder %v220, %v382
    %vm413 = vcmp.eq.s32.totalorder %v224, %v382
    %vm414 = vcmp.eq.s32.totalorder %v228, %v382
    %vm415 = vcmp.eq.s32.totalorder %v235, %v382
    %vm416 = vcmp.eq.s32.totalorder %v239, %v382
    %vm417 = vcmp.eq.s32.totalorder %v243, %v382
    %vm418 = vcmp.eq.s32.totalorder %v247, %v382
    %vm419 = vcmp.eq.s32.totalorder %v254, %v382
    %vm420 = vcmp.eq.s32.totalorder %v258, %v382
    %vm421 = vcmp.eq.s32.totalorder %v262, %v382
    %vm422 = vcmp.eq.s32.totalorder %v266, %v382
    %vm423 = vcmp.eq.s32.totalorder %v273, %v382
    %vm424 = vcmp.eq.s32.totalorder %v277, %v382
    %vm425 = vcmp.eq.s32.totalorder %v281, %v382
    %vm426 = vcmp.eq.s32.totalorder %v285, %v382
    %vm427 = vcmp.eq.s32.totalorder %v292, %v382
    %vm428 = vcmp.eq.s32.totalorder %v296, %v382
    %vm429 = vcmp.eq.s32.totalorder %v300, %v382
    %vm430 = vcmp.eq.s32.totalorder %v304, %v382
    %vm431 = vcmp.eq.s32.totalorder %v311, %v382
    %vm432 = vcmp.eq.s32.totalorder %v315, %v382
    %vm433 = vcmp.eq.s32.totalorder %v319, %v382
    %vm434 = vcmp.eq.s32.totalorder %v323, %v382
    %vm435 = vcmp.eq.s32.totalorder %v330, %v382
    %vm436 = vcmp.eq.s32.totalorder %v334, %v382
    %vm437 = vcmp.eq.s32.totalorder %v338, %v382
    %vm438 = vcmp.eq.s32.totalorder %v342, %v382
    %vm439 = vcmp.eq.s32.totalorder %v349, %v382
    %vm440 = vcmp.eq.s32.totalorder %v353, %v382
    %vm441 = vcmp.eq.s32.totalorder %v357, %v382
    %vm442 = vcmp.eq.s32.totalorder %v361, %v382
    %vm443 = vcmp.eq.s32.totalorder %v368, %v382
    %vm444 = vcmp.eq.s32.totalorder %v372, %v382
    %vm445 = vcmp.eq.s32.totalorder %v376, %v382
    %vm446 = vcmp.eq.s32.totalorder %v380, %v382
    %v447 = vsel %vm383, 1, 0
    %v448 = vsel %vm384, 1, 0
    %v449 = vsel %vm385, 1, 0
    %v450 = vsel %vm386, 1, 0
    %v451 = vsel %vm387, 1, 0
    %v452 = vsel %vm388, 1, 0
    %v453 = vsel %vm389, 1, 0
    %v454 = vsel %vm390, 1, 0
    %v455 = vsel %vm391, 1, 0
    %v456 = vsel %vm392, 1, 0
    %v457 = vsel %vm393, 1, 0
    %v458 = vsel %vm394, 1, 0
    %v459 = vsel %vm395, 1, 0
    %v460 = vsel %vm396, 1, 0
    %v461 = vsel %vm397, 1, 0
    %v462 = vsel %vm398, 1, 0
    %v463 = vsel %vm399, 1, 0
    %v464 = vsel %vm400, 1, 0
    %v465 = vsel %vm401, 1, 0
    %v466 = vsel %vm402, 1, 0
    %v467 = vsel %vm403, 1, 0
    %v468 = vsel %vm404, 1, 0
    %v469 = vsel %vm405, 1, 0
    %v470 = vsel %vm406, 1, 0
    %v471 = vsel %vm407, 1, 0
    %v472 = vsel %vm408, 1, 0
    %v473 = vsel %vm409, 1, 0
    %v474 = vsel %vm410, 1, 0
    %v475 = vsel %vm411, 1, 0
    %v476 = vsel %vm412, 1, 0
    %v477 = vsel %vm413, 1, 0
    %v478 = vsel %vm414, 1, 0
    %v479 = vsel %vm415, 1, 0
    %v480 = vsel %vm416, 1, 0
    %v481 = vsel %vm417, 1, 0
    %v482 = vsel %vm418, 1, 0
    %v483 = vsel %vm419, 1, 0
    %v484 = vsel %vm420, 1, 0
    %v485 = vsel %vm421, 1, 0
    %v486 = vsel %vm422, 1, 0
    %v487 = vsel %vm423, 1, 0
    %v488 = vsel %vm424, 1, 0
    %v489 = vsel %vm425, 1, 0
    %v490 = vsel %vm426, 1, 0
    %v491 = vsel %vm427, 1, 0
    %v492 = vsel %vm428, 1, 0
    %v493 = vsel %vm429, 1, 0
    %v494 = vsel %vm430, 1, 0
    %v495 = vsel %vm431, 1, 0
    %v496 = vsel %vm432, 1, 0
    %v497 = vsel %vm433, 1, 0
    %v498 = vsel %vm434, 1, 0
    %v499 = vsel %vm435, 1, 0
    %v500 = vsel %vm436, 1, 0
    %v501 = vsel %vm437, 1, 0
    %v502 = vsel %vm438, 1, 0
    %v503 = vsel %vm439, 1, 0
    %v504 = vsel %vm440, 1, 0
    %v505 = vsel %vm441, 1, 0
    %v506 = vsel %vm442, 1, 0
    %v507 = vsel %vm443, 1, 0
    %v508 = vsel %vm444, 1, 0
    %v509 = vsel %vm445, 1, 0
    %v510 = vsel %vm446, 1, 0
    %v511 = vcvt.s32.f32 %v447
    %v512 = vcvt.s32.f32 %v448
    %v513 = vcvt.s32.f32 %v449
    %v514 = vcvt.s32.f32 %v450
    %v515 = vcvt.s32.f32 %v451
    %v516 = vcvt.s32.f32 %v452
    %v517 = vcvt.s32.f32 %v453
    %v518 = vcvt.s32.f32 %v454
    %v519 = vcvt.s32.f32 %v455
    %v520 = vcvt.s32.f32 %v456
    %v521 = vcvt.s32.f32 %v457
    %v522 = vcvt.s32.f32 %v458
    %v523 = vcvt.s32.f32 %v459
    %v524 = vcvt.s32.f32 %v460
    %v525 = vcvt.s32.f32 %v461
    %v526 = vcvt.s32.f32 %v462
    %v527 = vcvt.s32.f32 %v463
    %v528 = vcvt.s32.f32 %v464
    %v529 = vcvt.s32.f32 %v465
    %v530 = vcvt.s32.f32 %v466
    %v531 = vcvt.s32.f32 %v467
    %v532 = vcvt.s32.f32 %v468
    %v533 = vcvt.s32.f32 %v469
    %v534 = vcvt.s32.f32 %v470
    %v535 = vcvt.s32.f32 %v471
    %v536 = vcvt.s32.f32 %v472
    %v537 = vcvt.s32.f32 %v473
    %v538 = vcvt.s32.f32 %v474
    %v539 = vcvt.s32.f32 %v475
    %v540 = vcvt.s32.f32 %v476
    %v541 = vcvt.s32.f32 %v477
    %v542 = vcvt.s32.f32 %v478
    %v543 = vcvt.s32.f32 %v479
    %v544 = vcvt.s32.f32 %v480
    %v545 = vcvt.s32.f32 %v481
    %v546 = vcvt.s32.f32 %v482
    %v547 = vcvt.s32.f32 %v483
    %v548 = vcvt.s32.f32 %v484
    %v549 = vcvt.s32.f32 %v485
    %v550 = vcvt.s32.f32 %v486
    %v551 = vcvt.s32.f32 %v487
    %v552 = vcvt.s32.f32 %v488
    %v553 = vcvt.s32.f32 %v489
    %v554 = vcvt.s32.f32 %v490
    %v555 = vcvt.s32.f32 %v491
    %v556 = vcvt.s32.f32 %v492
    %v557 = vcvt.s32.f32 %v493
    %v558 = vcvt.s32.f32 %v494
    %v559 = vcvt.s32.f32 %v495
    %v560 = vcvt.s32.f32 %v496
    %v561 = vcvt.s32.f32 %v497
    %v562 = vcvt.s32.f32 %v498
    %v563 = vcvt.s32.f32 %v499
    %v564 = vcvt.s32.f32 %v500
    %v565 = vcvt.s32.f32 %v501
    %v566 = vcvt.s32.f32 %v502
    %v567 = vcvt.s32.f32 %v503
    %v568 = vcvt.s32.f32 %v504
    %v569 = vcvt.s32.f32 %v505
    %v570 = vcvt.s32.f32 %v506
    %v571 = vcvt.s32.f32 %v507
    %v572 = vcvt.s32.f32 %v508
    %v573 = vcvt.s32.f32 %v509
    %v574 = vcvt.s32.f32 %v510
    %v575 = vld [vmem:[#allocation6] sm:$0xff]
    %v576 = vld [vmem:[#allocation6 + $0x8] sm:$0xff]
    %v577 = vld [vmem:[#allocation6 + $0x10] sm:$0xff]
    %v578 = vld [vmem:[#allocation6 + $0x18] sm:$0xff]
    %vm579 = vcmask 261120
    %v581 = vsel %vm579, %v511, 0
    %v584 = vsel %vm579, %v512, 0
    %v587 = vsel %vm579, %v513, 0
    %v590 = vsel %vm579, %v514, 0
    %v593 = vsel %vm579, %v515, 0
    %v596 = vsel %vm579, %v516, 0
    %v599 = vsel %vm579, %v517, 0
    %v602 = vsel %vm579, %v518, 0
    %v605 = vsel %vm579, %v519, 0
    %v608 = vsel %vm579, %v520, 0
    %v611 = vsel %vm579, %v521, 0
    %v614 = vsel %vm579, %v522, 0
    %v617 = vsel %vm579, %v523, 0
    %v620 = vsel %vm579, %v524, 0
    %v623 = vsel %vm579, %v525, 0
    %v626 = vsel %vm579, %v526, 0
    %v629 = vsel %vm579, %v527, 0
    %v632 = vsel %vm579, %v528, 0
    %v635 = vsel %vm579, %v529, 0
    %v638 = vsel %vm579, %v530, 0
    %v641 = vsel %vm579, %v531, 0
    %v644 = vsel %vm579, %v532, 0
    %v647 = vsel %vm579, %v533, 0
    %v650 = vsel %vm579, %v534, 0
    %v653 = vsel %vm579, %v535, 0
    %v656 = vsel %vm579, %v536, 0
    %v659 = vsel %vm579, %v537, 0
    %v662 = vsel %vm579, %v538, 0
    %v665 = vsel %vm579, %v539, 0
    %v668 = vsel %vm579, %v540, 0
    %v671 = vsel %vm579, %v541, 0
    %v674 = vsel %vm579, %v542, 0
    %v677 = vsel %vm579, %v543, 0
    %v680 = vsel %vm579, %v544, 0
    %v683 = vsel %vm579, %v545, 0
    %v686 = vsel %vm579, %v546, 0
    %v689 = vsel %vm579, %v547, 0
    %v692 = vsel %vm579, %v548, 0
    %v695 = vsel %vm579, %v549, 0
    %v698 = vsel %vm579, %v550, 0
    %v701 = vsel %vm579, %v551, 0
    %v704 = vsel %vm579, %v552, 0
    %v707 = vsel %vm579, %v553, 0
    %v710 = vsel %vm579, %v554, 0
    %v713 = vsel %vm579, %v555, 0
    %v716 = vsel %vm579, %v556, 0
    %v719 = vsel %vm579, %v557, 0
    %v722 = vsel %vm579, %v558, 0
    %v725 = vsel %vm579, %v559, 0
    %v728 = vsel %vm579, %v560, 0
    %v731 = vsel %vm579, %v561, 0
    %v734 = vsel %vm579, %v562, 0
    %v737 = vsel %vm579, %v563, 0
    %v740 = vsel %vm579, %v564, 0
    %v743 = vsel %vm579, %v565, 0
    %v746 = vsel %vm579, %v566, 0
    %v749 = vsel %vm579, %v567, 0
    %v752 = vsel %vm579, %v568, 0
    %v755 = vsel %vm579, %v569, 0
    %v758 = vsel %vm579, %v570, 0
    %v761 = vsel %vm579, %v571, 0
    %v764 = vsel %vm579, %v572, 0
    %v767 = vsel %vm579, %v573, 0
    %v770 = vsel %vm579, %v574, 0
    %772 = vmatprep.subr.mxu0 0.0
    %773 = vmatpush1.msra.mxu0 0.0
    %774 = vmatprep.subr.mxu0 0.0
    %775 = vmatpush1.msra.mxu0 0.0
    %776 = vmatprep.subr.mxu0 0.0
    %777 = vmatpush1.msra.mxu0 0.0
    %778 = vmatprep.subr.mxu0 0.0
    %779 = vmatpush1.msra.mxu0 0.0
    %780 = vmatprep.subr.mxu0 0.0
    %781 = vmatpush1.msra.mxu0 0.0
    %782 = vmatprep.subr.mxu0 0.0
    %783 = vmatpush1.msra.mxu0 0.0
    %784 = vmatprep.subr.mxu0 0.0
    %785 = vmatpush1.msra.mxu0 0.0
    %786 = vmatprep.subr.mxu0 0.0
    %787 = vmatpush1.msra.mxu0 0.0
    %788 = vmatprep.subr.mxu0 0.0
    %789 = vmatpush1.msra.mxu0 0.0
    %790 = vmatprep.subr.mxu0 0.0
    %791 = vmatpush1.msra.mxu0 0.0
    %792 = vmatprep.subr.mxu0 0.0
    %793 = vmatpush1.msra.mxu0 0.0
    %794 = vmatprep.subr.mxu0 0.0
    %795 = vmatpush1.msra.mxu0 0.0
    %796 = vmatprep.subr.mxu0 0.0
    %797 = vmatpush1.msra.mxu0 %v578
    %798 = vmatprep.subr.mxu0 0.0
    %799 = vmatpush1.msra.mxu0 %v577
    %800 = vmatprep.subr.mxu0 0.0
    %801 = vmatpush1.msra.mxu0 %v576
    %802 = vmatprep.subr.mxu0 0.0
    %803 = vmatpush1.msra.mxu0 %v575
    %804 = vmatprep.subr.mxu0 0.0
    %805 = vmatpush2.msra.mxu0 0.0
    %806 = vmatprep.subr.mxu0 0.0
    %807 = vmatpush2.msra.mxu0 0.0
    %808 = vmatprep.subr.mxu0 0.0
    %809 = vmatpush2.msra.mxu0 0.0
    %810 = vmatprep.subr.mxu0 0.0
    %811 = vmatpush2.msra.mxu0 0.0
    %812 = vmatprep.subr.mxu0 0.0
    %813 = vmatpush2.msra.mxu0 0.0
    %814 = vmatprep.subr.mxu0 0.0
    %815 = vmatpush2.msra.mxu0 0.0
    %816 = vmatprep.subr.mxu0 0.0
    %817 = vmatpush2.msra.mxu0 0.0
    %818 = vmatprep.subr.mxu0 0.0
    %819 = vmatpush2.msra.mxu0 0.0
    %820 = vmatprep.subr.mxu0 0.0
    %821 = vmatpush2.msra.mxu0 0.0
    %822 = vmatprep.subr.mxu0 0.0
    %823 = vmatpush2.msra.mxu0 0.0
    %824 = vmatprep.subr.mxu0 0.0
    %825 = vmatpush2.msra.mxu0 0.0
    %826 = vmatprep.subr.mxu0 0.0
    %827 = vmatpush2.msra.mxu0 0.0
    %828 = vmatprep.subr.mxu0 0.0
    %829 = vmatpush2.msra.mxu0 0.0
    %830 = vmatprep.subr.mxu0 0.0
    %831 = vmatpush2.msra.mxu0 0.0
    %832 = vmatprep.subr.mxu0 0.0
    %833 = vmatpush2.msra.mxu0 0.0
    %834 = vmatprep.subr.mxu0 0.0
    %835 = vmatpush2.msra.mxu0 0.0
    %836 = vmatprep.mubr.f32.mxu0 0.0
    %837 = vmatmul.mubr.f32.gmra.mxu0 %v581
    %v838 = vpop.f32.mrf.mxu0
    %v839 = vadd.f32 0.0, %v838
    %v840 = vpop.f32.mrf.mxu0
    %841 = vmatprep.mubr.f32.mxu0 0.0
    %842 = vmatmul.mubr.f32.gmra.mxu0 %v584
    %v843 = vpop.f32.mrf.mxu0
    %v844 = vadd.f32 0.0, %v843
    %v845 = vpop.f32.mrf.mxu0
    %846 = vmatprep.mubr.f32.mxu0 0.0
    %847 = vmatmul.mubr.f32.gmra.mxu0 %v587
    %v848 = vpop.f32.mrf.mxu0
    %v849 = vadd.f32 0.0, %v848
    %v850 = vpop.f32.mrf.mxu0
    %851 = vmatprep.mubr.f32.mxu0 0.0
    %852 = vmatmul.mubr.f32.gmra.mxu0 %v590
    %v853 = vpop.f32.mrf.mxu0
    %v854 = vadd.f32 0.0, %v853
    %v855 = vpop.f32.mrf.mxu0
    %856 = vmatprep.mubr.f32.mxu0 0.0
    %857 = vmatmul.mubr.f32.gmra.mxu0 %v593
    %v858 = vpop.f32.mrf.mxu0
    %v859 = vadd.f32 0.0, %v858
    %v860 = vpop.f32.mrf.mxu0
    %861 = vmatprep.mubr.f32.mxu0 0.0
    %862 = vmatmul.mubr.f32.gmra.mxu0 %v596
    %v863 = vpop.f32.mrf.mxu0
    %v864 = vadd.f32 0.0, %v863
    %v865 = vpop.f32.mrf.mxu0
    %866 = vmatprep.mubr.f32.mxu0 0.0
    %867 = vmatmul.mubr.f32.gmra.mxu0 %v599
    %v868 = vpop.f32.mrf.mxu0
    %v869 = vadd.f32 0.0, %v868
    %v870 = vpop.f32.mrf.mxu0
    %871 = vmatprep.mubr.f32.mxu0 0.0
    %872 = vmatmul.mubr.f32.gmra.mxu0 %v602
    %v873 = vpop.f32.mrf.mxu0
    %v874 = vadd.f32 0.0, %v873
    %v875 = vpop.f32.mrf.mxu0
    %876 = vmatprep.mubr.f32.mxu0 0.0
    %877 = vmatmul.mubr.f32.gmra.mxu0 %v605
    %v878 = vpop.f32.mrf.mxu0
    %v879 = vadd.f32 0.0, %v878
    %v880 = vpop.f32.mrf.mxu0
    %881 = vmatprep.mubr.f32.mxu0 0.0
    %882 = vmatmul.mubr.f32.gmra.mxu0 %v608
    %v883 = vpop.f32.mrf.mxu0
    %v884 = vadd.f32 0.0, %v883
    %v885 = vpop.f32.mrf.mxu0
    %886 = vmatprep.mubr.f32.mxu0 0.0
    %887 = vmatmul.mubr.f32.gmra.mxu0 %v611
    %v888 = vpop.f32.mrf.mxu0
    %v889 = vadd.f32 0.0, %v888
    %v890 = vpop.f32.mrf.mxu0
    %891 = vmatprep.mubr.f32.mxu0 0.0
    %892 = vmatmul.mubr.f32.gmra.mxu0 %v614
    %v893 = vpop.f32.mrf.mxu0
    %v894 = vadd.f32 0.0, %v893
    %v895 = vpop.f32.mrf.mxu0
    %896 = vmatprep.mubr.f32.mxu0 0.0
    %897 = vmatmul.mubr.f32.gmra.mxu0 %v617
    %v898 = vpop.f32.mrf.mxu0
    %v899 = vadd.f32 0.0, %v898
    %v900 = vpop.f32.mrf.mxu0
    %901 = vmatprep.mubr.f32.mxu0 0.0
    %902 = vmatmul.mubr.f32.gmra.mxu0 %v620
    %v903 = vpop.f32.mrf.mxu0
    %v904 = vadd.f32 0.0, %v903
    %v905 = vpop.f32.mrf.mxu0
    %906 = vmatprep.mubr.f32.mxu0 0.0
    %907 = vmatmul.mubr.f32.gmra.mxu0 %v623
    %v908 = vpop.f32.mrf.mxu0
    %v909 = vadd.f32 0.0, %v908
    %v910 = vpop.f32.mrf.mxu0
    %911 = vmatprep.mubr.f32.mxu0 0.0
    %912 = vmatmul.mubr.f32.gmra.mxu0 %v626
    %v913 = vpop.f32.mrf.mxu0
    %v914 = vadd.f32 0.0, %v913
    %v915 = vpop.f32.mrf.mxu0
    %916 = vmatprep.mubr.f32.mxu0 0.0
    %917 = vmatmul.mubr.f32.gmra.mxu0 %v629
    %v918 = vpop.f32.mrf.mxu0
    %v919 = vadd.f32 0.0, %v918
    %v920 = vpop.f32.mrf.mxu0
    %921 = vmatprep.mubr.f32.mxu0 0.0
    %922 = vmatmul.mubr.f32.gmra.mxu0 %v632
    %v923 = vpop.f32.mrf.mxu0
    %v924 = vadd.f32 0.0, %v923
    %v925 = vpop.f32.mrf.mxu0
    %926 = vmatprep.mubr.f32.mxu0 0.0
    %927 = vmatmul.mubr.f32.gmra.mxu0 %v635
    %v928 = vpop.f32.mrf.mxu0
    %v929 = vadd.f32 0.0, %v928
    %v930 = vpop.f32.mrf.mxu0
    %931 = vmatprep.mubr.f32.mxu0 0.0
    %932 = vmatmul.mubr.f32.gmra.mxu0 %v638
    %v933 = vpop.f32.mrf.mxu0
    %v934 = vadd.f32 0.0, %v933
    %v935 = vpop.f32.mrf.mxu0
    %936 = vmatprep.mubr.f32.mxu0 0.0
    %937 = vmatmul.mubr.f32.gmra.mxu0 %v641
    %v938 = vpop.f32.mrf.mxu0
    %v939 = vadd.f32 0.0, %v938
    %v940 = vpop.f32.mrf.mxu0
    %941 = vmatprep.mubr.f32.mxu0 0.0
    %942 = vmatmul.mubr.f32.gmra.mxu0 %v644
    %v943 = vpop.f32.mrf.mxu0
    %v944 = vadd.f32 0.0, %v943
    %v945 = vpop.f32.mrf.mxu0
    %946 = vmatprep.mubr.f32.mxu0 0.0
    %947 = vmatmul.mubr.f32.gmra.mxu0 %v647
    %v948 = vpop.f32.mrf.mxu0
    %v949 = vadd.f32 0.0, %v948
    %v950 = vpop.f32.mrf.mxu0
    %951 = vmatprep.mubr.f32.mxu0 0.0
    %952 = vmatmul.mubr.f32.gmra.mxu0 %v650
    %v953 = vpop.f32.mrf.mxu0
    %v954 = vadd.f32 0.0, %v953
    %v955 = vpop.f32.mrf.mxu0
    %956 = vmatprep.mubr.f32.mxu0 0.0
    %957 = vmatmul.mubr.f32.gmra.mxu0 %v653
    %v958 = vpop.f32.mrf.mxu0
    %v959 = vadd.f32 0.0, %v958
    %v960 = vpop.f32.mrf.mxu0
    %961 = vmatprep.mubr.f32.mxu0 0.0
    %962 = vmatmul.mubr.f32.gmra.mxu0 %v656
    %v963 = vpop.f32.mrf.mxu0
    %v964 = vadd.f32 0.0, %v963
    %v965 = vpop.f32.mrf.mxu0
    %966 = vmatprep.mubr.f32.mxu0 0.0
    %967 = vmatmul.mubr.f32.gmra.mxu0 %v659
    %v968 = vpop.f32.mrf.mxu0
    %v969 = vadd.f32 0.0, %v968
    %v970 = vpop.f32.mrf.mxu0
    %971 = vmatprep.mubr.f32.mxu0 0.0
    %972 = vmatmul.mubr.f32.gmra.mxu0 %v662
    %v973 = vpop.f32.mrf.mxu0
    %v974 = vadd.f32 0.0, %v973
    %v975 = vpop.f32.mrf.mxu0
    %976 = vmatprep.mubr.f32.mxu0 0.0
    %977 = vmatmul.mubr.f32.gmra.mxu0 %v665
    %v978 = vpop.f32.mrf.mxu0
    %v979 = vadd.f32 0.0, %v978
    %v980 = vpop.f32.mrf.mxu0
    %981 = vmatprep.mubr.f32.mxu0 0.0
    %982 = vmatmul.mubr.f32.gmra.mxu0 %v668
    %v983 = vpop.f32.mrf.mxu0
    %v984 = vadd.f32 0.0, %v983
    %v985 = vpop.f32.mrf.mxu0
    %986 = vmatprep.mubr.f32.mxu0 0.0
    %987 = vmatmul.mubr.f32.gmra.mxu0 %v671
    %v988 = vpop.f32.mrf.mxu0
    %v989 = vadd.f32 0.0, %v988
    %v990 = vpop.f32.mrf.mxu0
    %991 = vmatprep.mubr.f32.mxu0 0.0
    %992 = vmatmul.mubr.f32.gmra.mxu0 %v674
    %v993 = vpop.f32.mrf.mxu0
    %v994 = vadd.f32 0.0, %v993
    %v995 = vpop.f32.mrf.mxu0
    %996 = vmatprep.mubr.f32.mxu0 0.0
    %997 = vmatmul.mubr.f32.gmra.mxu0 %v677
    %v998 = vpop.f32.mrf.mxu0
    %v999 = vadd.f32 0.0, %v998
    %v1000 = vpop.f32.mrf.mxu0
    %1001 = vmatprep.mubr.f32.mxu0 0.0
    %1002 = vmatmul.mubr.f32.gmra.mxu0 %v680
    %v1003 = vpop.f32.mrf.mxu0
    %v1004 = vadd.f32 0.0, %v1003
    %v1005 = vpop.f32.mrf.mxu0
    %1006 = vmatprep.mubr.f32.mxu0 0.0
    %1007 = vmatmul.mubr.f32.gmra.mxu0 %v683
    %v1008 = vpop.f32.mrf.mxu0
    %v1009 = vadd.f32 0.0, %v1008
    %v1010 = vpop.f32.mrf.mxu0
    %1011 = vmatprep.mubr.f32.mxu0 0.0
    %1012 = vmatmul.mubr.f32.gmra.mxu0 %v686
    %v1013 = vpop.f32.mrf.mxu0
    %v1014 = vadd.f32 0.0, %v1013
    %v1015 = vpop.f32.mrf.mxu0
    %1016 = vmatprep.mubr.f32.mxu0 0.0
    %1017 = vmatmul.mubr.f32.gmra.mxu0 %v689
    %v1018 = vpop.f32.mrf.mxu0
    %v1019 = vadd.f32 0.0, %v1018
    %v1020 = vpop.f32.mrf.mxu0
    %1021 = vmatprep.mubr.f32.mxu0 0.0
    %1022 = vmatmul.mubr.f32.gmra.mxu0 %v692
    %v1023 = vpop.f32.mrf.mxu0
    %v1024 = vadd.f32 0.0, %v1023
    %v1025 = vpop.f32.mrf.mxu0
    %1026 = vmatprep.mubr.f32.mxu0 0.0
    %1027 = vmatmul.mubr.f32.gmra.mxu0 %v695
    %v1028 = vpop.f32.mrf.mxu0
    %v1029 = vadd.f32 0.0, %v1028
    %v1030 = vpop.f32.mrf.mxu0
    %1031 = vmatprep.mubr.f32.mxu0 0.0
    %1032 = vmatmul.mubr.f32.gmra.mxu0 %v698
    %v1033 = vpop.f32.mrf.mxu0
    %v1034 = vadd.f32 0.0, %v1033
    %v1035 = vpop.f32.mrf.mxu0
    %1036 = vmatprep.mubr.f32.mxu0 0.0
    %1037 = vmatmul.mubr.f32.gmra.mxu0 %v701
    %v1038 = vpop.f32.mrf.mxu0
    %v1039 = vadd.f32 0.0, %v1038
    %v1040 = vpop.f32.mrf.mxu0
    %1041 = vmatprep.mubr.f32.mxu0 0.0
    %1042 = vmatmul.mubr.f32.gmra.mxu0 %v704
    %v1043 = vpop.f32.mrf.mxu0
    %v1044 = vadd.f32 0.0, %v1043
    %v1045 = vpop.f32.mrf.mxu0
    %1046 = vmatprep.mubr.f32.mxu0 0.0
    %1047 = vmatmul.mubr.f32.gmra.mxu0 %v707
    %v1048 = vpop.f32.mrf.mxu0
    %v1049 = vadd.f32 0.0, %v1048
    %v1050 = vpop.f32.mrf.mxu0
    %1051 = vmatprep.mubr.f32.mxu0 0.0
    %1052 = vmatmul.mubr.f32.gmra.mxu0 %v710
    %v1053 = vpop.f32.mrf.mxu0
    %v1054 = vadd.f32 0.0, %v1053
    %v1055 = vpop.f32.mrf.mxu0
    %1056 = vmatprep.mubr.f32.mxu0 0.0
    %1057 = vmatmul.mubr.f32.gmra.mxu0 %v713
    %v1058 = vpop.f32.mrf.mxu0
    %v1059 = vadd.f32 0.0, %v1058
    %v1060 = vpop.f32.mrf.mxu0
    %1061 = vmatprep.mubr.f32.mxu0 0.0
    %1062 = vmatmul.mubr.f32.gmra.mxu0 %v716
    %v1063 = vpop.f32.mrf.mxu0
    %v1064 = vadd.f32 0.0, %v1063
    %v1065 = vpop.f32.mrf.mxu0
    %1066 = vmatprep.mubr.f32.mxu0 0.0
    %1067 = vmatmul.mubr.f32.gmra.mxu0 %v719
    %v1068 = vpop.f32.mrf.mxu0
    %v1069 = vadd.f32 0.0, %v1068
    %v1070 = vpop.f32.mrf.mxu0
    %1071 = vmatprep.mubr.f32.mxu0 0.0
    %1072 = vmatmul.mubr.f32.gmra.mxu0 %v722
    %v1073 = vpop.f32.mrf.mxu0
    %v1074 = vadd.f32 0.0, %v1073
    %v1075 = vpop.f32.mrf.mxu0
    %1076 = vmatprep.mubr.f32.mxu0 0.0
    %1077 = vmatmul.mubr.f32.gmra.mxu0 %v725
    %v1078 = vpop.f32.mrf.mxu0
    %v1079 = vadd.f32 0.0, %v1078
    %v1080 = vpop.f32.mrf.mxu0
    %1081 = vmatprep.mubr.f32.mxu0 0.0
    %1082 = vmatmul.mubr.f32.gmra.mxu0 %v728
    %v1083 = vpop.f32.mrf.mxu0
    %v1084 = vadd.f32 0.0, %v1083
    %v1085 = vpop.f32.mrf.mxu0
    %1086 = vmatprep.mubr.f32.mxu0 0.0
    %1087 = vmatmul.mubr.f32.gmra.mxu0 %v731
    %v1088 = vpop.f32.mrf.mxu0
    %v1089 = vadd.f32 0.0, %v1088
    %v1090 = vpop.f32.mrf.mxu0
    %1091 = vmatprep.mubr.f32.mxu0 0.0
    %1092 = vmatmul.mubr.f32.gmra.mxu0 %v734
    %v1093 = vpop.f32.mrf.mxu0
    %v1094 = vadd.f32 0.0, %v1093
    %v1095 = vpop.f32.mrf.mxu0
    %1096 = vmatprep.mubr.f32.mxu0 0.0
    %1097 = vmatmul.mubr.f32.gmra.mxu0 %v737
    %v1098 = vpop.f32.mrf.mxu0
    %v1099 = vadd.f32 0.0, %v1098
    %v1100 = vpop.f32.mrf.mxu0
    %1101 = vmatprep.mubr.f32.mxu0 0.0
    %1102 = vmatmul.mubr.f32.gmra.mxu0 %v740
    %v1103 = vpop.f32.mrf.mxu0
    %v1104 = vadd.f32 0.0, %v1103
    %v1105 = vpop.f32.mrf.mxu0
    %1106 = vmatprep.mubr.f32.mxu0 0.0
    %1107 = vmatmul.mubr.f32.gmra.mxu0 %v743
    %v1108 = vpop.f32.mrf.mxu0
    %v1109 = vadd.f32 0.0, %v1108
    %v1110 = vpop.f32.mrf.mxu0
    %1111 = vmatprep.mubr.f32.mxu0 0.0
    %1112 = vmatmul.mubr.f32.gmra.mxu0 %v746
    %v1113 = vpop.f32.mrf.mxu0
    %v1114 = vadd.f32 0.0, %v1113
    %v1115 = vpop.f32.mrf.mxu0
    %1116 = vmatprep.mubr.f32.mxu0 0.0
    %1117 = vmatmul.mubr.f32.gmra.mxu0 %v749
    %v1118 = vpop.f32.mrf.mxu0
    %v1119 = vadd.f32 0.0, %v1118
    %v1120 = vpop.f32.mrf.mxu0
    %1121 = vmatprep.mubr.f32.mxu0 0.0
    %1122 = vmatmul.mubr.f32.gmra.mxu0 %v752
    %v1123 = vpop.f32.mrf.mxu0
    %v1124 = vadd.f32 0.0, %v1123
    %v1125 = vpop.f32.mrf.mxu0
    %1126 = vmatprep.mubr.f32.mxu0 0.0
    %1127 = vmatmul.mubr.f32.gmra.mxu0 %v755
    %v1128 = vpop.f32.mrf.mxu0
    %v1129 = vadd.f32 0.0, %v1128
    %v1130 = vpop.f32.mrf.mxu0
    %1131 = vmatprep.mubr.f32.mxu0 0.0
    %1132 = vmatmul.mubr.f32.gmra.mxu0 %v758
    %v1133 = vpop.f32.mrf.mxu0
    %v1134 = vadd.f32 0.0, %v1133
    %v1135 = vpop.f32.mrf.mxu0
    %1136 = vmatprep.mubr.f32.mxu0 0.0
    %1137 = vmatmul.mubr.f32.gmra.mxu0 %v761
    %v1138 = vpop.f32.mrf.mxu0
    %v1139 = vadd.f32 0.0, %v1138
    %v1140 = vpop.f32.mrf.mxu0
    %1141 = vmatprep.mubr.f32.mxu0 0.0
    %1142 = vmatmul.mubr.f32.gmra.mxu0 %v764
    %v1143 = vpop.f32.mrf.mxu0
    %v1144 = vadd.f32 0.0, %v1143
    %v1145 = vpop.f32.mrf.mxu0
    %1146 = vmatprep.mubr.f32.mxu0 0.0
    %1147 = vmatmul.mubr.f32.gmra.mxu0 %v767
    %v1148 = vpop.f32.mrf.mxu0
    %v1149 = vadd.f32 0.0, %v1148
    %v1150 = vpop.f32.mrf.mxu0
    %1151 = vmatprep.mubr.f32.mxu0 0.0
    %1152 = vmatmul.mubr.f32.gmra.mxu0 %v770
    %v1153 = vpop.f32.mrf.mxu0
    %v1154 = vadd.f32 0.0, %v1153
    %v1155 = vpop.f32.mrf.mxu0
    %1156 = vdwg.mxu0
    %v1157 = vld [vmem:[#allocation4] sm:$0xff]
    %v1158 = vld [vmem:[#allocation4 + $0x8] sm:$0xff]
    %v1161 = vcombine.high %v1157, %v1157
    %v1163 = vunpack.c.l.s4 1966171168
    %v1164 = vunpack.c.0.s8 %v1163
    %v1165 = vlaneseq
    %v1166 = vshrl.u32 %v1165, 7
    %v1167 = vsub.s32 %v1164, %v1166
    %v1168 = vrot.slane %v1157, %v1167
    %v1170 = vunpack.c.l.s4 1966171168
    %v1171 = vunpack.c.0.s8 %v1170
    %v1172 = vlaneseq
    %v1173 = vshrl.u32 %v1172, 7
    %v1174 = vsub.s32 %v1171, %v1173
    %v1175 = vrot.slane %v1161, %v1174
    %v1176 = vcombine.high %v1168, %v1168
    %v1177 = vcombine.high %v1175, %v1175
    %v1179 = vunpack.c.l.s4 1966171168
    %v1180 = vunpack.c.0.s8 %v1179
    %v1181 = vlaneseq
    %v1182 = vshrl.u32 %v1181, 7
    %v1183 = vsub.s32 %v1180, %v1182
    %v1184 = vrot.slane %v1168, %v1183
    %v1186 = vunpack.c.l.s4 1966171168
    %v1187 = vunpack.c.0.s8 %v1186
    %v1188 = vlaneseq
    %v1189 = vshrl.u32 %v1188, 7
    %v1190 = vsub.s32 %v1187, %v1189
    %v1191 = vrot.slane %v1175, %v1190
    %v1193 = vunpack.c.l.s4 1966171168
    %v1194 = vunpack.c.0.s8 %v1193
    %v1195 = vlaneseq
    %v1196 = vshrl.u32 %v1195, 7
    %v1197 = vsub.s32 %v1194, %v1196
    %v1198 = vrot.slane %v1176, %v1197
    %v1200 = vunpack.c.l.s4 1966171168
    %v1201 = vunpack.c.0.s8 %v1200
    %v1202 = vlaneseq
    %v1203 = vshrl.u32 %v1202, 7
    %v1204 = vsub.s32 %v1201, %v1203
    %v1205 = vrot.slane %v1177, %v1204
    %v1206 = vcombine.high %v1184, %v1184
    %v1207 = vcombine.high %v1191, %v1191
    %v1208 = vcombine.high %v1198, %v1198
    %v1209 = vcombine.high %v1205, %v1205
    %v1210 = vcombine.high %v1158, %v1158
    %v1212 = vunpack.c.l.s4 1966171168
    %v1213 = vunpack.c.0.s8 %v1212
    %v1214 = vlaneseq
    %v1215 = vshrl.u32 %v1214, 7
    %v1216 = vsub.s32 %v1213, %v1215
    %v1217 = vrot.slane %v1158, %v1216
    %v1219 = vunpack.c.l.s4 1966171168
    %v1220 = vunpack.c.0.s8 %v1219
    %v1221 = vlaneseq
    %v1222 = vshrl.u32 %v1221, 7
    %v1223 = vsub.s32 %v1220, %v1222
    %v1224 = vrot.slane %v1210, %v1223
    %v1225 = vcombine.high %v1217, %v1217
    %v1226 = vcombine.high %v1224, %v1224
    %v1228 = vunpack.c.l.s4 1966171168
    %v1229 = vunpack.c.0.s8 %v1228
    %v1230 = vlaneseq
    %v1231 = vshrl.u32 %v1230, 7
    %v1232 = vsub.s32 %v1229, %v1231
    %v1233 = vrot.slane %v1217, %v1232
    %v1235 = vunpack.c.l.s4 1966171168
    %v1236 = vunpack.c.0.s8 %v1235
    %v1237 = vlaneseq
    %v1238 = vshrl.u32 %v1237, 7
    %v1239 = vsub.s32 %v1236, %v1238
    %v1240 = vrot.slane %v1224, %v1239
    %v1242 = vunpack.c.l.s4 1966171168
    %v1243 = vunpack.c.0.s8 %v1242
    %v1244 = vlaneseq
    %v1245 = vshrl.u32 %v1244, 7
    %v1246 = vsub.s32 %v1243, %v1245
    %v1247 = vrot.slane %v1225, %v1246
    %v1249 = vunpack.c.l.s4 1966171168
    %v1250 = vunpack.c.0.s8 %v1249
    %v1251 = vlaneseq
    %v1252 = vshrl.u32 %v1251, 7
    %v1253 = vsub.s32 %v1250, %v1252
    %v1254 = vrot.slane %v1226, %v1253
    %v1255 = vcombine.high %v1233, %v1233
    %v1256 = vcombine.high %v1240, %v1240
    %v1257 = vcombine.high %v1247, %v1247
    %v1258 = vcombine.high %v1254, %v1254
    %v1259 = vlaneseq
    %v1260 = vshrl.u32 %v1259, 7
    %v1261 = vsub.s32 0, %v1260
    %v1262 = vrot.slane %v1184, %v1261
    %v1263 = vlaneseq
    %v1264 = vshrl.u32 %v1263, 7
    %v1265 = vsub.s32 0, %v1264
    %v1266 = vrot.slane %v1198, %v1265
    %v1267 = vlaneseq
    %v1268 = vshrl.u32 %v1267, 7
    %v1269 = vsub.s32 0, %v1268
    %v1270 = vrot.slane %v1206, %v1269
    %v1271 = vlaneseq
    %v1272 = vshrl.u32 %v1271, 7
    %v1273 = vsub.s32 0, %v1272
    %v1274 = vrot.slane %v1208, %v1273
    %v1275 = vlaneseq
    %v1276 = vshrl.u32 %v1275, 7
    %v1277 = vsub.s32 0, %v1276
    %v1278 = vrot.slane %v1191, %v1277
    %v1279 = vlaneseq
    %v1280 = vshrl.u32 %v1279, 7
    %v1281 = vsub.s32 0, %v1280
    %v1282 = vrot.slane %v1205, %v1281
    %v1283 = vlaneseq
    %v1284 = vshrl.u32 %v1283, 7
    %v1285 = vsub.s32 0, %v1284
    %v1286 = vrot.slane %v1207, %v1285
    %v1287 = vlaneseq
    %v1288 = vshrl.u32 %v1287, 7
    %v1289 = vsub.s32 0, %v1288
    %v1290 = vrot.slane %v1209, %v1289
    %v1291 = vlaneseq
    %v1292 = vshrl.u32 %v1291, 7
    %v1293 = vsub.s32 0, %v1292
    %v1294 = vrot.slane %v1233, %v1293
    %v1295 = vlaneseq
    %v1296 = vshrl.u32 %v1295, 7
    %v1297 = vsub.s32 0, %v1296
    %v1298 = vrot.slane %v1247, %v1297
    %v1299 = vlaneseq
    %v1300 = vshrl.u32 %v1299, 7
    %v1301 = vsub.s32 0, %v1300
    %v1302 = vrot.slane %v1255, %v1301
    %v1303 = vlaneseq
    %v1304 = vshrl.u32 %v1303, 7
    %v1305 = vsub.s32 0, %v1304
    %v1306 = vrot.slane %v1257, %v1305
    %v1307 = vlaneseq
    %v1308 = vshrl.u32 %v1307, 7
    %v1309 = vsub.s32 0, %v1308
    %v1310 = vrot.slane %v1240, %v1309
    %v1311 = vlaneseq
    %v1312 = vshrl.u32 %v1311, 7
    %v1313 = vsub.s32 0, %v1312
    %v1314 = vrot.slane %v1254, %v1313
    %v1315 = vlaneseq
    %v1316 = vshrl.u32 %v1315, 7
    %v1317 = vsub.s32 0, %v1316
    %v1318 = vrot.slane %v1256, %v1317
    %v1319 = vlaneseq
    %v1320 = vshrl.u32 %v1319, 7
    %v1321 = vsub.s32 0, %v1320
    %v1322 = vrot.slane %v1258, %v1321
    %v1339 = vsub.f32 %v839, %v1262
    %v1340 = vsub.f32 %v844, %v1262
    %v1341 = vsub.f32 %v849, %v1262
    %v1342 = vsub.f32 %v854, %v1262
    %v1343 = vsub.f32 %v859, %v1266
    %v1344 = vsub.f32 %v864, %v1266
    %v1345 = vsub.f32 %v869, %v1266
    %v1346 = vsub.f32 %v874, %v1266
    %v1347 = vsub.f32 %v879, %v1270
    %v1348 = vsub.f32 %v884, %v1270
    %v1349 = vsub.f32 %v889, %v1270
    %v1350 = vsub.f32 %v894, %v1270
    %v1351 = vsub.f32 %v899, %v1274
    %v1352 = vsub.f32 %v904, %v1274
    %v1353 = vsub.f32 %v909, %v1274
    %v1354 = vsub.f32 %v914, %v1274
    %v1355 = vsub.f32 %v919, %v1278
    %v1356 = vsub.f32 %v924, %v1278
    %v1357 = vsub.f32 %v929, %v1278
    %v1358 = vsub.f32 %v934, %v1278
    %v1359 = vsub.f32 %v939, %v1282
    %v1360 = vsub.f32 %v944, %v1282
    %v1361 = vsub.f32 %v949, %v1282
    %v1362 = vsub.f32 %v954, %v1282
    %v1363 = vsub.f32 %v959, %v1286
    %v1364 = vsub.f32 %v964, %v1286
    %v1365 = vsub.f32 %v969, %v1286
    %v1366 = vsub.f32 %v974, %v1286
    %v1367 = vsub.f32 %v979, %v1290
    %v1368 = vsub.f32 %v984, %v1290
    %v1369 = vsub.f32 %v989, %v1290
    %v1370 = vsub.f32 %v994, %v1290
    %v1371 = vsub.f32 %v999, %v1294
    %v1372 = vsub.f32 %v1004, %v1294
    %v1373 = vsub.f32 %v1009, %v1294
    %v1374 = vsub.f32 %v1014, %v1294
    %v1375 = vsub.f32 %v1019, %v1298
    %v1376 = vsub.f32 %v1024, %v1298
    %v1377 = vsub.f32 %v1029, %v1298
    %v1378 = vsub.f32 %v1034, %v1298
    %v1379 = vsub.f32 %v1039, %v1302
    %v1380 = vsub.f32 %v1044, %v1302
    %v1381 = vsub.f32 %v1049, %v1302
    %v1382 = vsub.f32 %v1054, %v1302
    %v1383 = vsub.f32 %v1059, %v1306
    %v1384 = vsub.f32 %v1064, %v1306
    %v1385 = vsub.f32 %v1069, %v1306
    %v1386 = vsub.f32 %v1074, %v1306
    %v1387 = vsub.f32 %v1079, %v1310
    %v1388 = vsub.f32 %v1084, %v1310
    %v1389 = vsub.f32 %v1089, %v1310
    %v1390 = vsub.f32 %v1094, %v1310
    %v1391 = vsub.f32 %v1099, %v1314
    %v1392 = vsub.f32 %v1104, %v1314
    %v1393 = vsub.f32 %v1109, %v1314
    %v1394 = vsub.f32 %v1114, %v1314
    %v1395 = vsub.f32 %v1119, %v1318
    %v1396 = vsub.f32 %v1124, %v1318
    %v1397 = vsub.f32 %v1129, %v1318
    %v1398 = vsub.f32 %v1134, %v1318
    %v1399 = vsub.f32 %v1139, %v1322
    %v1400 = vsub.f32 %v1144, %v1322
    %v1401 = vsub.f32 %v1149, %v1322
    %v1402 = vsub.f32 %v1154, %v1322
    %v1403 = vmax.f32 %v1339, 0.0
    %v1404 = vmax.f32 %v1340, 0.0
    %v1405 = vmax.f32 %v1341, 0.0
    %v1406 = vmax.f32 %v1342, 0.0
    %v1407 = vmax.f32 %v1343, 0.0
    %v1408 = vmax.f32 %v1344, 0.0
    %v1409 = vmax.f32 %v1345, 0.0
    %v1410 = vmax.f32 %v1346, 0.0
    %v1411 = vmax.f32 %v1347, 0.0
    %v1412 = vmax.f32 %v1348, 0.0
    %v1413 = vmax.f32 %v1349, 0.0
    %v1414 = vmax.f32 %v1350, 0.0
    %v1415 = vmax.f32 %v1351, 0.0
    %v1416 = vmax.f32 %v1352, 0.0
    %v1417 = vmax.f32 %v1353, 0.0
    %v1418 = vmax.f32 %v1354, 0.0
    %v1419 = vmax.f32 %v1355, 0.0
    %v1420 = vmax.f32 %v1356, 0.0
    %v1421 = vmax.f32 %v1357, 0.0
    %v1422 = vmax.f32 %v1358, 0.0
    %v1423 = vmax.f32 %v1359, 0.0
    %v1424 = vmax.f32 %v1360, 0.0
    %v1425 = vmax.f32 %v1361, 0.0
    %v1426 = vmax.f32 %v1362, 0.0
    %v1427 = vmax.f32 %v1363, 0.0
    %v1428 = vmax.f32 %v1364, 0.0
    %v1429 = vmax.f32 %v1365, 0.0
    %v1430 = vmax.f32 %v1366, 0.0
    %v1431 = vmax.f32 %v1367, 0.0
    %v1432 = vmax.f32 %v1368, 0.0
    %v1433 = vmax.f32 %v1369, 0.0
    %v1434 = vmax.f32 %v1370, 0.0
    %v1435 = vmax.f32 %v1371, 0.0
    %v1436 = vmax.f32 %v1372, 0.0
    %v1437 = vmax.f32 %v1373, 0.0
    %v1438 = vmax.f32 %v1374, 0.0
    %v1439 = vmax.f32 %v1375, 0.0
    %v1440 = vmax.f32 %v1376, 0.0
    %v1441 = vmax.f32 %v1377, 0.0
    %v1442 = vmax.f32 %v1378, 0.0
    %v1443 = vmax.f32 %v1379, 0.0
    %v1444 = vmax.f32 %v1380, 0.0
    %v1445 = vmax.f32 %v1381, 0.0
    %v1446 = vmax.f32 %v1382, 0.0
    %v1447 = vmax.f32 %v1383, 0.0
    %v1448 = vmax.f32 %v1384, 0.0
    %v1449 = vmax.f32 %v1385, 0.0
    %v1450 = vmax.f32 %v1386, 0.0
    %v1451 = vmax.f32 %v1387, 0.0
    %v1452 = vmax.f32 %v1388, 0.0
    %v1453 = vmax.f32 %v1389, 0.0
    %v1454 = vmax.f32 %v1390, 0.0
    %v1455 = vmax.f32 %v1391, 0.0
    %v1456 = vmax.f32 %v1392, 0.0
    %v1457 = vmax.f32 %v1393, 0.0
    %v1458 = vmax.f32 %v1394, 0.0
    %v1459 = vmax.f32 %v1395, 0.0
    %v1460 = vmax.f32 %v1396, 0.0
    %v1461 = vmax.f32 %v1397, 0.0
    %v1462 = vmax.f32 %v1398, 0.0
    %v1463 = vmax.f32 %v1399, 0.0
    %v1464 = vmax.f32 %v1400, 0.0
    %v1465 = vmax.f32 %v1401, 0.0
    %v1466 = vmax.f32 %v1402, 0.0
    %v1467 = vld [vmem:[#allocation7] sm:$0xff]
    %v1468 = vld [vmem:[#allocation7 + $0x8] sm:$0xff]
    %v1469 = vld [vmem:[#allocation7 + $0x10] sm:$0xff]
    %v1470 = vld [vmem:[#allocation7 + $0x18] sm:$0xff]
    %v1471 = vld [vmem:[%s4] sm:$0x1]
    %v1473 = vlaneseq
    %v1474 = vshrl.u32 %v1473, 7
    %v1475 = vsub.s32 0, %v1474
    %v1476 = vrot.slane %v1471, %v1475
    %v1479 = vsel %vm579, %v1403, 0
    %v1482 = vsel %vm579, %v1404, 0
    %v1485 = vsel %vm579, %v1405, 0
    %v1488 = vsel %vm579, %v1406, 0
    %v1491 = vsel %vm579, %v1407, 0
    %v1494 = vsel %vm579, %v1408, 0
    %v1497 = vsel %vm579, %v1409, 0
    %v1500 = vsel %vm579, %v1410, 0
    %v1503 = vsel %vm579, %v1411, 0
    %v1506 = vsel %vm579, %v1412, 0
    %v1509 = vsel %vm579, %v1413, 0
    %v1512 = vsel %vm579, %v1414, 0
    %v1515 = vsel %vm579, %v1415, 0
    %v1518 = vsel %vm579, %v1416, 0
    %v1521 = vsel %vm579, %v1417, 0
    %v1524 = vsel %vm579, %v1418, 0
    %v1527 = vsel %vm579, %v1419, 0
    %v1530 = vsel %vm579, %v1420, 0
    %v1533 = vsel %vm579, %v1421, 0
    %v1536 = vsel %vm579, %v1422, 0
    %v1539 = vsel %vm579, %v1423, 0
    %v1542 = vsel %vm579, %v1424, 0
    %v1545 = vsel %vm579, %v1425, 0
    %v1548 = vsel %vm579, %v1426, 0
    %v1551 = vsel %vm579, %v1427, 0
    %v1554 = vsel %vm579, %v1428, 0
    %v1557 = vsel %vm579, %v1429, 0
    %v1560 = vsel %vm579, %v1430, 0
    %v1563 = vsel %vm579, %v1431, 0
    %v1566 = vsel %vm579, %v1432, 0
    %v1569 = vsel %vm579, %v1433, 0
    %v1572 = vsel %vm579, %v1434, 0
    %v1575 = vsel %vm579, %v1435, 0
    %v1578 = vsel %vm579, %v1436, 0
    %v1581 = vsel %vm579, %v1437, 0
    %v1584 = vsel %vm579, %v1438, 0
    %v1587 = vsel %vm579, %v1439, 0
    %v1590 = vsel %vm579, %v1440, 0
    %v1593 = vsel %vm579, %v1441, 0
    %v1596 = vsel %vm579, %v1442, 0
    %v1599 = vsel %vm579, %v1443, 0
    %v1602 = vsel %vm579, %v1444, 0
    %v1605 = vsel %vm579, %v1445, 0
    %v1608 = vsel %vm579, %v1446, 0
    %v1611 = vsel %vm579, %v1447, 0
    %v1614 = vsel %vm579, %v1448, 0
    %v1617 = vsel %vm579, %v1449, 0
    %v1620 = vsel %vm579, %v1450, 0
    %v1623 = vsel %vm579, %v1451, 0
    %v1626 = vsel %vm579, %v1452, 0
    %v1629 = vsel %vm579, %v1453, 0
    %v1632 = vsel %vm579, %v1454, 0
    %v1635 = vsel %vm579, %v1455, 0
    %v1638 = vsel %vm579, %v1456, 0
    %v1641 = vsel %vm579, %v1457, 0
    %v1644 = vsel %vm579, %v1458, 0
    %v1647 = vsel %vm579, %v1459, 0
    %v1650 = vsel %vm579, %v1460, 0
    %v1653 = vsel %vm579, %v1461, 0
    %v1656 = vsel %vm579, %v1462, 0
    %v1659 = vsel %vm579, %v1463, 0
    %v1662 = vsel %vm579, %v1464, 0
    %v1665 = vsel %vm579, %v1465, 0
    %v1668 = vsel %vm579, %v1466, 0
    %1670 = vmatprep.subr.mxu0 0.0
    %1671 = vmatpush1.msra.mxu0 0.0
    %1672 = vmatprep.subr.mxu0 0.0
    %1673 = vmatpush1.msra.mxu0 0.0
    %1674 = vmatprep.subr.mxu0 0.0
    %1675 = vmatpush1.msra.mxu0 0.0
    %1676 = vmatprep.subr.mxu0 0.0
    %1677 = vmatpush1.msra.mxu0 0.0
    %1678 = vmatprep.subr.mxu0 0.0
    %1679 = vmatpush1.msra.mxu0 0.0
    %1680 = vmatprep.subr.mxu0 0.0
    %1681 = vmatpush1.msra.mxu0 0.0
    %1682 = vmatprep.subr.mxu0 0.0
    %1683 = vmatpush1.msra.mxu0 0.0
    %1684 = vmatprep.subr.mxu0 0.0
    %1685 = vmatpush1.msra.mxu0 0.0
    %1686 = vmatprep.subr.mxu0 0.0
    %1687 = vmatpush1.msra.mxu0 0.0
    %1688 = vmatprep.subr.mxu0 0.0
    %1689 = vmatpush1.msra.mxu0 0.0
    %1690 = vmatprep.subr.mxu0 0.0
    %1691 = vmatpush1.msra.mxu0 0.0
    %1692 = vmatprep.subr.mxu0 0.0
    %1693 = vmatpush1.msra.mxu0 0.0
    %1694 = vmatprep.subr.mxu0 0.0
    %1695 = vmatpush1.msra.mxu0 %v1470
    %1696 = vmatprep.subr.mxu0 0.0
    %1697 = vmatpush1.msra.mxu0 %v1469
    %1698 = vmatprep.subr.mxu0 0.0
    %1699 = vmatpush1.msra.mxu0 %v1468
    %1700 = vmatprep.subr.mxu0 0.0
    %1701 = vmatpush1.msra.mxu0 %v1467
    %1702 = vmatprep.subr.mxu0 0.0
    %1703 = vmatpush2.msra.mxu0 0.0
    %1704 = vmatprep.subr.mxu0 0.0
    %1705 = vmatpush2.msra.mxu0 0.0
    %1706 = vmatprep.subr.mxu0 0.0
    %1707 = vmatpush2.msra.mxu0 0.0
    %1708 = vmatprep.subr.mxu0 0.0
    %1709 = vmatpush2.msra.mxu0 0.0
    %1710 = vmatprep.subr.mxu0 0.0
    %1711 = vmatpush2.msra.mxu0 0.0
    %1712 = vmatprep.subr.mxu0 0.0
    %1713 = vmatpush2.msra.mxu0 0.0
    %1714 = vmatprep.subr.mxu0 0.0
    %1715 = vmatpush2.msra.mxu0 0.0
    %1716 = vmatprep.subr.mxu0 0.0
    %1717 = vmatpush2.msra.mxu0 0.0
    %1718 = vmatprep.subr.mxu0 0.0
    %1719 = vmatpush2.msra.mxu0 0.0
    %1720 = vmatprep.subr.mxu0 0.0
    %1721 = vmatpush2.msra.mxu0 0.0
    %1722 = vmatprep.subr.mxu0 0.0
    %1723 = vmatpush2.msra.mxu0 0.0
    %1724 = vmatprep.subr.mxu0 0.0
    %1725 = vmatpush2.msra.mxu0 0.0
    %1726 = vmatprep.subr.mxu0 0.0
    %1727 = vmatpush2.msra.mxu0 0.0
    %1728 = vmatprep.subr.mxu0 0.0
    %1729 = vmatpush2.msra.mxu0 0.0
    %1730 = vmatprep.subr.mxu0 0.0
    %1731 = vmatpush2.msra.mxu0 0.0
    %1732 = vmatprep.subr.mxu0 0.0
    %1733 = vmatpush2.msra.mxu0 0.0
    %1734 = vmatprep.mubr.f32.mxu0 0.0
    %1735 = vmatmul.mubr.f32.gmra.mxu0 %v1479
    %v1736 = vpop.f32.mrf.mxu0
    %v1737 = vadd.f32 %v1476, %v1736
    %v1738 = vpop.f32.mrf.mxu0
    %1739 = vmatprep.mubr.f32.mxu0 0.0
    %1740 = vmatmul.mubr.f32.gmra.mxu0 %v1482
    %v1741 = vpop.f32.mrf.mxu0
    %v1742 = vadd.f32 %v1476, %v1741
    %v1743 = vpop.f32.mrf.mxu0
    %1744 = vmatprep.mubr.f32.mxu0 0.0
    %1745 = vmatmul.mubr.f32.gmra.mxu0 %v1485
    %v1746 = vpop.f32.mrf.mxu0
    %v1747 = vadd.f32 %v1476, %v1746
    %v1748 = vpop.f32.mrf.mxu0
    %1749 = vmatprep.mubr.f32.mxu0 0.0
    %1750 = vmatmul.mubr.f32.gmra.mxu0 %v1488
    %v1751 = vpop.f32.mrf.mxu0
    %v1752 = vadd.f32 %v1476, %v1751
    %v1753 = vpop.f32.mrf.mxu0
    %1754 = vmatprep.mubr.f32.mxu0 0.0
    %1755 = vmatmul.mubr.f32.gmra.mxu0 %v1491
    %v1756 = vpop.f32.mrf.mxu0
    %v1757 = vadd.f32 %v1476, %v1756
    %v1758 = vpop.f32.mrf.mxu0
    %1759 = vmatprep.mubr.f32.mxu0 0.0
    %1760 = vmatmul.mubr.f32.gmra.mxu0 %v1494
    %v1761 = vpop.f32.mrf.mxu0
    %v1762 = vadd.f32 %v1476, %v1761
    %v1763 = vpop.f32.mrf.mxu0
    %1764 = vmatprep.mubr.f32.mxu0 0.0
    %1765 = vmatmul.mubr.f32.gmra.mxu0 %v1497
    %v1766 = vpop.f32.mrf.mxu0
    %v1767 = vadd.f32 %v1476, %v1766
    %v1768 = vpop.f32.mrf.mxu0
    %1769 = vmatprep.mubr.f32.mxu0 0.0
    %1770 = vmatmul.mubr.f32.gmra.mxu0 %v1500
    %v1771 = vpop.f32.mrf.mxu0
    %v1772 = vadd.f32 %v1476, %v1771
    %v1773 = vpop.f32.mrf.mxu0
    %1774 = vmatprep.mubr.f32.mxu0 0.0
    %1775 = vmatmul.mubr.f32.gmra.mxu0 %v1503
    %v1776 = vpop.f32.mrf.mxu0
    %v1777 = vadd.f32 %v1476, %v1776
    %v1778 = vpop.f32.mrf.mxu0
    %1779 = vmatprep.mubr.f32.mxu0 0.0
    %1780 = vmatmul.mubr.f32.gmra.mxu0 %v1506
    %v1781 = vpop.f32.mrf.mxu0
    %v1782 = vadd.f32 %v1476, %v1781
    %v1783 = vpop.f32.mrf.mxu0
    %1784 = vmatprep.mubr.f32.mxu0 0.0
    %1785 = vmatmul.mubr.f32.gmra.mxu0 %v1509
    %v1786 = vpop.f32.mrf.mxu0
    %v1787 = vadd.f32 %v1476, %v1786
    %v1788 = vpop.f32.mrf.mxu0
    %1789 = vmatprep.mubr.f32.mxu0 0.0
    %1790 = vmatmul.mubr.f32.gmra.mxu0 %v1512
    %v1791 = vpop.f32.mrf.mxu0
    %v1792 = vadd.f32 %v1476, %v1791
    %v1793 = vpop.f32.mrf.mxu0
    %1794 = vmatprep.mubr.f32.mxu0 0.0
    %1795 = vmatmul.mubr.f32.gmra.mxu0 %v1515
    %v1796 = vpop.f32.mrf.mxu0
    %v1797 = vadd.f32 %v1476, %v1796
    %v1798 = vpop.f32.mrf.mxu0
    %1799 = vmatprep.mubr.f32.mxu0 0.0
    %1800 = vmatmul.mubr.f32.gmra.mxu0 %v1518
    %v1801 = vpop.f32.mrf.mxu0
    %v1802 = vadd.f32 %v1476, %v1801
    %v1803 = vpop.f32.mrf.mxu0
    %1804 = vmatprep.mubr.f32.mxu0 0.0
    %1805 = vmatmul.mubr.f32.gmra.mxu0 %v1521
    %v1806 = vpop.f32.mrf.mxu0
    %v1807 = vadd.f32 %v1476, %v1806
    %v1808 = vpop.f32.mrf.mxu0
    %1809 = vmatprep.mubr.f32.mxu0 0.0
    %1810 = vmatmul.mubr.f32.gmra.mxu0 %v1524
    %v1811 = vpop.f32.mrf.mxu0
    %v1812 = vadd.f32 %v1476, %v1811
    %v1813 = vpop.f32.mrf.mxu0
    %1814 = vmatprep.mubr.f32.mxu0 0.0
    %1815 = vmatmul.mubr.f32.gmra.mxu0 %v1527
    %v1816 = vpop.f32.mrf.mxu0
    %v1817 = vadd.f32 %v1476, %v1816
    %v1818 = vpop.f32.mrf.mxu0
    %1819 = vmatprep.mubr.f32.mxu0 0.0
    %1820 = vmatmul.mubr.f32.gmra.mxu0 %v1530
    %v1821 = vpop.f32.mrf.mxu0
    %v1822 = vadd.f32 %v1476, %v1821
    %v1823 = vpop.f32.mrf.mxu0
    %1824 = vmatprep.mubr.f32.mxu0 0.0
    %1825 = vmatmul.mubr.f32.gmra.mxu0 %v1533
    %v1826 = vpop.f32.mrf.mxu0
    %v1827 = vadd.f32 %v1476, %v1826
    %v1828 = vpop.f32.mrf.mxu0
    %1829 = vmatprep.mubr.f32.mxu0 0.0
    %1830 = vmatmul.mubr.f32.gmra.mxu0 %v1536
    %v1831 = vpop.f32.mrf.mxu0
    %v1832 = vadd.f32 %v1476, %v1831
    %v1833 = vpop.f32.mrf.mxu0
    %1834 = vmatprep.mubr.f32.mxu0 0.0
    %1835 = vmatmul.mubr.f32.gmra.mxu0 %v1539
    %v1836 = vpop.f32.mrf.mxu0
    %v1837 = vadd.f32 %v1476, %v1836
    %v1838 = vpop.f32.mrf.mxu0
    %1839 = vmatprep.mubr.f32.mxu0 0.0
    %1840 = vmatmul.mubr.f32.gmra.mxu0 %v1542
    %v1841 = vpop.f32.mrf.mxu0
    %v1842 = vadd.f32 %v1476, %v1841
    %v1843 = vpop.f32.mrf.mxu0
    %1844 = vmatprep.mubr.f32.mxu0 0.0
    %1845 = vmatmul.mubr.f32.gmra.mxu0 %v1545
    %v1846 = vpop.f32.mrf.mxu0
    %v1847 = vadd.f32 %v1476, %v1846
    %v1848 = vpop.f32.mrf.mxu0
    %1849 = vmatprep.mubr.f32.mxu0 0.0
    %1850 = vmatmul.mubr.f32.gmra.mxu0 %v1548
    %v1851 = vpop.f32.mrf.mxu0
    %v1852 = vadd.f32 %v1476, %v1851
    %v1853 = vpop.f32.mrf.mxu0
    %1854 = vmatprep.mubr.f32.mxu0 0.0
    %1855 = vmatmul.mubr.f32.gmra.mxu0 %v1551
    %v1856 = vpop.f32.mrf.mxu0
    %v1857 = vadd.f32 %v1476, %v1856
    %v1858 = vpop.f32.mrf.mxu0
    %1859 = vmatprep.mubr.f32.mxu0 0.0
    %1860 = vmatmul.mubr.f32.gmra.mxu0 %v1554
    %v1861 = vpop.f32.mrf.mxu0
    %v1862 = vadd.f32 %v1476, %v1861
    %v1863 = vpop.f32.mrf.mxu0
    %1864 = vmatprep.mubr.f32.mxu0 0.0
    %1865 = vmatmul.mubr.f32.gmra.mxu0 %v1557
    %v1866 = vpop.f32.mrf.mxu0
    %v1867 = vadd.f32 %v1476, %v1866
    %v1868 = vpop.f32.mrf.mxu0
    %1869 = vmatprep.mubr.f32.mxu0 0.0
    %1870 = vmatmul.mubr.f32.gmra.mxu0 %v1560
    %v1871 = vpop.f32.mrf.mxu0
    %v1872 = vadd.f32 %v1476, %v1871
    %v1873 = vpop.f32.mrf.mxu0
    %1874 = vmatprep.mubr.f32.mxu0 0.0
    %1875 = vmatmul.mubr.f32.gmra.mxu0 %v1563
    %v1876 = vpop.f32.mrf.mxu0
    %v1877 = vadd.f32 %v1476, %v1876
    %v1878 = vpop.f32.mrf.mxu0
    %1879 = vmatprep.mubr.f32.mxu0 0.0
    %1880 = vmatmul.mubr.f32.gmra.mxu0 %v1566
    %v1881 = vpop.f32.mrf.mxu0
    %v1882 = vadd.f32 %v1476, %v1881
    %v1883 = vpop.f32.mrf.mxu0
    %1884 = vmatprep.mubr.f32.mxu0 0.0
    %1885 = vmatmul.mubr.f32.gmra.mxu0 %v1569
    %v1886 = vpop.f32.mrf.mxu0
    %v1887 = vadd.f32 %v1476, %v1886
    %v1888 = vpop.f32.mrf.mxu0
    %1889 = vmatprep.mubr.f32.mxu0 0.0
    %1890 = vmatmul.mubr.f32.gmra.mxu0 %v1572
    %v1891 = vpop.f32.mrf.mxu0
    %v1892 = vadd.f32 %v1476, %v1891
    %v1893 = vpop.f32.mrf.mxu0
    %1894 = vmatprep.mubr.f32.mxu0 0.0
    %1895 = vmatmul.mubr.f32.gmra.mxu0 %v1575
    %v1896 = vpop.f32.mrf.mxu0
    %v1897 = vadd.f32 %v1476, %v1896
    %v1898 = vpop.f32.mrf.mxu0
    %1899 = vmatprep.mubr.f32.mxu0 0.0
    %1900 = vmatmul.mubr.f32.gmra.mxu0 %v1578
    %v1901 = vpop.f32.mrf.mxu0
    %v1902 = vadd.f32 %v1476, %v1901
    %v1903 = vpop.f32.mrf.mxu0
    %1904 = vmatprep.mubr.f32.mxu0 0.0
    %1905 = vmatmul.mubr.f32.gmra.mxu0 %v1581
    %v1906 = vpop.f32.mrf.mxu0
    %v1907 = vadd.f32 %v1476, %v1906
    %v1908 = vpop.f32.mrf.mxu0
    %1909 = vmatprep.mubr.f32.mxu0 0.0
    %1910 = vmatmul.mubr.f32.gmra.mxu0 %v1584
    %v1911 = vpop.f32.mrf.mxu0
    %v1912 = vadd.f32 %v1476, %v1911
    %v1913 = vpop.f32.mrf.mxu0
    %1914 = vmatprep.mubr.f32.mxu0 0.0
    %1915 = vmatmul.mubr.f32.gmra.mxu0 %v1587
    %v1916 = vpop.f32.mrf.mxu0
    %v1917 = vadd.f32 %v1476, %v1916
    %v1918 = vpop.f32.mrf.mxu0
    %1919 = vmatprep.mubr.f32.mxu0 0.0
    %1920 = vmatmul.mubr.f32.gmra.mxu0 %v1590
    %v1921 = vpop.f32.mrf.mxu0
    %v1922 = vadd.f32 %v1476, %v1921
    %v1923 = vpop.f32.mrf.mxu0
    %1924 = vmatprep.mubr.f32.mxu0 0.0
    %1925 = vmatmul.mubr.f32.gmra.mxu0 %v1593
    %v1926 = vpop.f32.mrf.mxu0
    %v1927 = vadd.f32 %v1476, %v1926
    %v1928 = vpop.f32.mrf.mxu0
    %1929 = vmatprep.mubr.f32.mxu0 0.0
    %1930 = vmatmul.mubr.f32.gmra.mxu0 %v1596
    %v1931 = vpop.f32.mrf.mxu0
    %v1932 = vadd.f32 %v1476, %v1931
    %v1933 = vpop.f32.mrf.mxu0
    %1934 = vmatprep.mubr.f32.mxu0 0.0
    %1935 = vmatmul.mubr.f32.gmra.mxu0 %v1599
    %v1936 = vpop.f32.mrf.mxu0
    %v1937 = vadd.f32 %v1476, %v1936
    %v1938 = vpop.f32.mrf.mxu0
    %1939 = vmatprep.mubr.f32.mxu0 0.0
    %1940 = vmatmul.mubr.f32.gmra.mxu0 %v1602
    %v1941 = vpop.f32.mrf.mxu0
    %v1942 = vadd.f32 %v1476, %v1941
    %v1943 = vpop.f32.mrf.mxu0
    %1944 = vmatprep.mubr.f32.mxu0 0.0
    %1945 = vmatmul.mubr.f32.gmra.mxu0 %v1605
    %v1946 = vpop.f32.mrf.mxu0
    %v1947 = vadd.f32 %v1476, %v1946
    %v1948 = vpop.f32.mrf.mxu0
    %1949 = vmatprep.mubr.f32.mxu0 0.0
    %1950 = vmatmul.mubr.f32.gmra.mxu0 %v1608
    %v1951 = vpop.f32.mrf.mxu0
    %v1952 = vadd.f32 %v1476, %v1951
    %v1953 = vpop.f32.mrf.mxu0
    %1954 = vmatprep.mubr.f32.mxu0 0.0
    %1955 = vmatmul.mubr.f32.gmra.mxu0 %v1611
    %v1956 = vpop.f32.mrf.mxu0
    %v1957 = vadd.f32 %v1476, %v1956
    %v1958 = vpop.f32.mrf.mxu0
    %1959 = vmatprep.mubr.f32.mxu0 0.0
    %1960 = vmatmul.mubr.f32.gmra.mxu0 %v1614
    %v1961 = vpop.f32.mrf.mxu0
    %v1962 = vadd.f32 %v1476, %v1961
    %v1963 = vpop.f32.mrf.mxu0
    %1964 = vmatprep.mubr.f32.mxu0 0.0
    %1965 = vmatmul.mubr.f32.gmra.mxu0 %v1617
    %v1966 = vpop.f32.mrf.mxu0
    %v1967 = vadd.f32 %v1476, %v1966
    %v1968 = vpop.f32.mrf.mxu0
    %1969 = vmatprep.mubr.f32.mxu0 0.0
    %1970 = vmatmul.mubr.f32.gmra.mxu0 %v1620
    %v1971 = vpop.f32.mrf.mxu0
    %v1972 = vadd.f32 %v1476, %v1971
    %v1973 = vpop.f32.mrf.mxu0
    %1974 = vmatprep.mubr.f32.mxu0 0.0
    %1975 = vmatmul.mubr.f32.gmra.mxu0 %v1623
    %v1976 = vpop.f32.mrf.mxu0
    %v1977 = vadd.f32 %v1476, %v1976
    %v1978 = vpop.f32.mrf.mxu0
    %1979 = vmatprep.mubr.f32.mxu0 0.0
    %1980 = vmatmul.mubr.f32.gmra.mxu0 %v1626
    %v1981 = vpop.f32.mrf.mxu0
    %v1982 = vadd.f32 %v1476, %v1981
    %v1983 = vpop.f32.mrf.mxu0
    %1984 = vmatprep.mubr.f32.mxu0 0.0
    %1985 = vmatmul.mubr.f32.gmra.mxu0 %v1629
    %v1986 = vpop.f32.mrf.mxu0
    %v1987 = vadd.f32 %v1476, %v1986
    %v1988 = vpop.f32.mrf.mxu0
    %1989 = vmatprep.mubr.f32.mxu0 0.0
    %1990 = vmatmul.mubr.f32.gmra.mxu0 %v1632
    %v1991 = vpop.f32.mrf.mxu0
    %v1992 = vadd.f32 %v1476, %v1991
    %v1993 = vpop.f32.mrf.mxu0
    %1994 = vmatprep.mubr.f32.mxu0 0.0
    %1995 = vmatmul.mubr.f32.gmra.mxu0 %v1635
    %v1996 = vpop.f32.mrf.mxu0
    %v1997 = vadd.f32 %v1476, %v1996
    %v1998 = vpop.f32.mrf.mxu0
    %1999 = vmatprep.mubr.f32.mxu0 0.0
    %2000 = vmatmul.mubr.f32.gmra.mxu0 %v1638
    %v2001 = vpop.f32.mrf.mxu0
    %v2002 = vadd.f32 %v1476, %v2001
    %v2003 = vpop.f32.mrf.mxu0
    %2004 = vmatprep.mubr.f32.mxu0 0.0
    %2005 = vmatmul.mubr.f32.gmra.mxu0 %v1641
    %v2006 = vpop.f32.mrf.mxu0
    %v2007 = vadd.f32 %v1476, %v2006
    %v2008 = vpop.f32.mrf.mxu0
    %2009 = vmatprep.mubr.f32.mxu0 0.0
    %2010 = vmatmul.mubr.f32.gmra.mxu0 %v1644
    %v2011 = vpop.f32.mrf.mxu0
    %v2012 = vadd.f32 %v1476, %v2011
    %v2013 = vpop.f32.mrf.mxu0
    %2014 = vmatprep.mubr.f32.mxu0 0.0
    %2015 = vmatmul.mubr.f32.gmra.mxu0 %v1647
    %v2016 = vpop.f32.mrf.mxu0
    %v2017 = vadd.f32 %v1476, %v2016
    %v2018 = vpop.f32.mrf.mxu0
    %2019 = vmatprep.mubr.f32.mxu0 0.0
    %2020 = vmatmul.mubr.f32.gmra.mxu0 %v1650
    %v2021 = vpop.f32.mrf.mxu0
    %v2022 = vadd.f32 %v1476, %v2021
    %v2023 = vpop.f32.mrf.mxu0
    %2024 = vmatprep.mubr.f32.mxu0 0.0
    %2025 = vmatmul.mubr.f32.gmra.mxu0 %v1653
    %v2026 = vpop.f32.mrf.mxu0
    %v2027 = vadd.f32 %v1476, %v2026
    %v2028 = vpop.f32.mrf.mxu0
    %2029 = vmatprep.mubr.f32.mxu0 0.0
    %2030 = vmatmul.mubr.f32.gmra.mxu0 %v1656
    %v2031 = vpop.f32.mrf.mxu0
    %v2032 = vadd.f32 %v1476, %v2031
    %v2033 = vpop.f32.mrf.mxu0
    %2034 = vmatprep.mubr.f32.mxu0 0.0
    %2035 = vmatmul.mubr.f32.gmra.mxu0 %v1659
    %v2036 = vpop.f32.mrf.mxu0
    %v2037 = vadd.f32 %v1476, %v2036
    %v2038 = vpop.f32.mrf.mxu0
    %2039 = vmatprep.mubr.f32.mxu0 0.0
    %2040 = vmatmul.mubr.f32.gmra.mxu0 %v1662
    %v2041 = vpop.f32.mrf.mxu0
    %v2042 = vadd.f32 %v1476, %v2041
    %v2043 = vpop.f32.mrf.mxu0
    %2044 = vmatprep.mubr.f32.mxu0 0.0
    %2045 = vmatmul.mubr.f32.gmra.mxu0 %v1665
    %v2046 = vpop.f32.mrf.mxu0
    %v2047 = vadd.f32 %v1476, %v2046
    %v2048 = vpop.f32.mrf.mxu0
    %2049 = vmatprep.mubr.f32.mxu0 0.0
    %2050 = vmatmul.mubr.f32.gmra.mxu0 %v1668
    %v2051 = vpop.f32.mrf.mxu0
    %v2052 = vadd.f32 %v1476, %v2051
    %v2053 = vpop.f32.mrf.mxu0
    %2054 = vdwg.mxu0
    %v2055 = vmax.f32 %v1737, 0.0
    %v2056 = vmax.f32 %v1742, 0.0
    %v2057 = vmax.f32 %v1747, 0.0
    %v2058 = vmax.f32 %v1752, 0.0
    %v2059 = vmax.f32 %v1757, 0.0
    %v2060 = vmax.f32 %v1762, 0.0
    %v2061 = vmax.f32 %v1767, 0.0
    %v2062 = vmax.f32 %v1772, 0.0
    %v2063 = vmax.f32 %v1777, 0.0
    %v2064 = vmax.f32 %v1782, 0.0
    %v2065 = vmax.f32 %v1787, 0.0
    %v2066 = vmax.f32 %v1792, 0.0
    %v2067 = vmax.f32 %v1797, 0.0
    %v2068 = vmax.f32 %v1802, 0.0
    %v2069 = vmax.f32 %v1807, 0.0
    %v2070 = vmax.f32 %v1812, 0.0
    %v2071 = vmax.f32 %v1817, 0.0
    %v2072 = vmax.f32 %v1822, 0.0
    %v2073 = vmax.f32 %v1827, 0.0
    %v2074 = vmax.f32 %v1832, 0.0
    %v2075 = vmax.f32 %v1837, 0.0
    %v2076 = vmax.f32 %v1842, 0.0
    %v2077 = vmax.f32 %v1847, 0.0
    %v2078 = vmax.f32 %v1852, 0.0
    %v2079 = vmax.f32 %v1857, 0.0
    %v2080 = vmax.f32 %v1862, 0.0
    %v2081 = vmax.f32 %v1867, 0.0
    %v2082 = vmax.f32 %v1872, 0.0
    %v2083 = vmax.f32 %v1877, 0.0
    %v2084 = vmax.f32 %v1882, 0.0
    %v2085 = vmax.f32 %v1887, 0.0
    %v2086 = vmax.f32 %v1892, 0.0
    %v2087 = vmax.f32 %v1897, 0.0
    %v2088 = vmax.f32 %v1902, 0.0
    %v2089 = vmax.f32 %v1907, 0.0
    %v2090 = vmax.f32 %v1912, 0.0
    %v2091 = vmax.f32 %v1917, 0.0
    %v2092 = vmax.f32 %v1922, 0.0
    %v2093 = vmax.f32 %v1927, 0.0
    %v2094 = vmax.f32 %v1932, 0.0
    %v2095 = vmax.f32 %v1937, 0.0
    %v2096 = vmax.f32 %v1942, 0.0
    %v2097 = vmax.f32 %v1947, 0.0
    %v2098 = vmax.f32 %v1952, 0.0
    %v2099 = vmax.f32 %v1957, 0.0
    %v2100 = vmax.f32 %v1962, 0.0
    %v2101 = vmax.f32 %v1967, 0.0
    %v2102 = vmax.f32 %v1972, 0.0
    %v2103 = vmax.f32 %v1977, 0.0
    %v2104 = vmax.f32 %v1982, 0.0
    %v2105 = vmax.f32 %v1987, 0.0
    %v2106 = vmax.f32 %v1992, 0.0
    %v2107 = vmax.f32 %v1997, 0.0
    %v2108 = vmax.f32 %v2002, 0.0
    %v2109 = vmax.f32 %v2007, 0.0
    %v2110 = vmax.f32 %v2012, 0.0
    %v2111 = vmax.f32 %v2017, 0.0
    %v2112 = vmax.f32 %v2022, 0.0
    %v2113 = vmax.f32 %v2027, 0.0
    %v2114 = vmax.f32 %v2032, 0.0
    %v2115 = vmax.f32 %v2037, 0.0
    %v2116 = vmax.f32 %v2042, 0.0
    %v2117 = vmax.f32 %v2047, 0.0
    %v2118 = vmax.f32 %v2052, 0.0
    %v2119 = vsel %vm579, %v2055, -inf
    %v2120 = vsel %vm579, %v2056, -inf
    %v2121 = vmax.f32 %v2119, %v2120
    %v2122 = vsel %vm579, %v2057, -inf
    %v2123 = vmax.f32 %v2121, %v2122
    %v2124 = vsel %vm579, %v2058, -inf
    %v2125 = vmax.f32 %v2123, %v2124
    %v2126 = vrot.slane %v2125, 4
    %v2127 = vmax.f32 %v2125, %v2126
    %v2128 = vrot.slane %v2127, 2
    %v2129 = vmax.f32 %v2127, %v2128
    %v2130 = vrot.slane %v2129, 1
    %v2131 = vmax.f32 %v2129, %v2130
    %v2132 = vsel %vm579, %v2059, -inf
    %v2133 = vsel %vm579, %v2060, -inf
    %v2134 = vmax.f32 %v2132, %v2133
    %v2135 = vsel %vm579, %v2061, -inf
    %v2136 = vmax.f32 %v2134, %v2135
    %v2137 = vsel %vm579, %v2062, -inf
    %v2138 = vmax.f32 %v2136, %v2137
    %v2139 = vrot.slane %v2138, 4
    %v2140 = vmax.f32 %v2138, %v2139
    %v2141 = vrot.slane %v2140, 2
    %v2142 = vmax.f32 %v2140, %v2141
    %v2143 = vrot.slane %v2142, 1
    %v2144 = vmax.f32 %v2142, %v2143
    %v2145 = vsel %vm579, %v2063, -inf
    %v2146 = vsel %vm579, %v2064, -inf
    %v2147 = vmax.f32 %v2145, %v2146
    %v2148 = vsel %vm579, %v2065, -inf
    %v2149 = vmax.f32 %v2147, %v2148
    %v2150 = vsel %vm579, %v2066, -inf
    %v2151 = vmax.f32 %v2149, %v2150
    %v2152 = vrot.slane %v2151, 4
    %v2153 = vmax.f32 %v2151, %v2152
    %v2154 = vrot.slane %v2153, 2
    %v2155 = vmax.f32 %v2153, %v2154
    %v2156 = vrot.slane %v2155, 1
    %v2157 = vmax.f32 %v2155, %v2156
    %v2158 = vsel %vm579, %v2067, -inf
    %v2159 = vsel %vm579, %v2068, -inf
    %v2160 = vmax.f32 %v2158, %v2159
    %v2161 = vsel %vm579, %v2069, -inf
    %v2162 = vmax.f32 %v2160, %v2161
    %v2163 = vsel %vm579, %v2070, -inf
    %v2164 = vmax.f32 %v2162, %v2163
    %v2165 = vrot.slane %v2164, 4
    %v2166 = vmax.f32 %v2164, %v2165
    %v2167 = vrot.slane %v2166, 2
    %v2168 = vmax.f32 %v2166, %v2167
    %v2169 = vrot.slane %v2168, 1
    %v2170 = vmax.f32 %v2168, %v2169
    %v2171 = vsel %vm579, %v2071, -inf
    %v2172 = vsel %vm579, %v2072, -inf
    %v2173 = vmax.f32 %v2171, %v2172
    %v2174 = vsel %vm579, %v2073, -inf
    %v2175 = vmax.f32 %v2173, %v2174
    %v2176 = vsel %vm579, %v2074, -inf
    %v2177 = vmax.f32 %v2175, %v2176
    %v2178 = vrot.slane %v2177, 4
    %v2179 = vmax.f32 %v2177, %v2178
    %v2180 = vrot.slane %v2179, 2
    %v2181 = vmax.f32 %v2179, %v2180
    %v2182 = vrot.slane %v2181, 1
    %v2183 = vmax.f32 %v2181, %v2182
    %v2184 = vsel %vm579, %v2075, -inf
    %v2185 = vsel %vm579, %v2076, -inf
    %v2186 = vmax.f32 %v2184, %v2185
    %v2187 = vsel %vm579, %v2077, -inf
    %v2188 = vmax.f32 %v2186, %v2187
    %v2189 = vsel %vm579, %v2078, -inf
    %v2190 = vmax.f32 %v2188, %v2189
    %v2191 = vrot.slane %v2190, 4
    %v2192 = vmax.f32 %v2190, %v2191
    %v2193 = vrot.slane %v2192, 2
    %v2194 = vmax.f32 %v2192, %v2193
    %v2195 = vrot.slane %v2194, 1
    %v2196 = vmax.f32 %v2194, %v2195
    %v2197 = vsel %vm579, %v2079, -inf
    %v2198 = vsel %vm579, %v2080, -inf
    %v2199 = vmax.f32 %v2197, %v2198
    %v2200 = vsel %vm579, %v2081, -inf
    %v2201 = vmax.f32 %v2199, %v2200
    %v2202 = vsel %vm579, %v2082, -inf
    %v2203 = vmax.f32 %v2201, %v2202
    %v2204 = vrot.slane %v2203, 4
    %v2205 = vmax.f32 %v2203, %v2204
    %v2206 = vrot.slane %v2205, 2
    %v2207 = vmax.f32 %v2205, %v2206
    %v2208 = vrot.slane %v2207, 1
    %v2209 = vmax.f32 %v2207, %v2208
    %v2210 = vsel %vm579, %v2083, -inf
    %v2211 = vsel %vm579, %v2084, -inf
    %v2212 = vmax.f32 %v2210, %v2211
    %v2213 = vsel %vm579, %v2085, -inf
    %v2214 = vmax.f32 %v2212, %v2213
    %v2215 = vsel %vm579, %v2086, -inf
    %v2216 = vmax.f32 %v2214, %v2215
    %v2217 = vrot.slane %v2216, 4
    %v2218 = vmax.f32 %v2216, %v2217
    %v2219 = vrot.slane %v2218, 2
    %v2220 = vmax.f32 %v2218, %v2219
    %v2221 = vrot.slane %v2220, 1
    %v2222 = vmax.f32 %v2220, %v2221
    %v2223 = vsel %vm579, %v2087, -inf
    %v2224 = vsel %vm579, %v2088, -inf
    %v2225 = vmax.f32 %v2223, %v2224
    %v2226 = vsel %vm579, %v2089, -inf
    %v2227 = vmax.f32 %v2225, %v2226
    %v2228 = vsel %vm579, %v2090, -inf
    %v2229 = vmax.f32 %v2227, %v2228
    %v2230 = vrot.slane %v2229, 4
    %v2231 = vmax.f32 %v2229, %v2230
    %v2232 = vrot.slane %v2231, 2
    %v2233 = vmax.f32 %v2231, %v2232
    %v2234 = vrot.slane %v2233, 1
    %v2235 = vmax.f32 %v2233, %v2234
    %v2236 = vsel %vm579, %v2091, -inf
    %v2237 = vsel %vm579, %v2092, -inf
    %v2238 = vmax.f32 %v2236, %v2237
    %v2239 = vsel %vm579, %v2093, -inf
    %v2240 = vmax.f32 %v2238, %v2239
    %v2241 = vsel %vm579, %v2094, -inf
    %v2242 = vmax.f32 %v2240, %v2241
    %v2243 = vrot.slane %v2242, 4
    %v2244 = vmax.f32 %v2242, %v2243
    %v2245 = vrot.slane %v2244, 2
    %v2246 = vmax.f32 %v2244, %v2245
    %v2247 = vrot.slane %v2246, 1
    %v2248 = vmax.f32 %v2246, %v2247
    %v2249 = vsel %vm579, %v2095, -inf
    %v2250 = vsel %vm579, %v2096, -inf
    %v2251 = vmax.f32 %v2249, %v2250
    %v2252 = vsel %vm579, %v2097, -inf
    %v2253 = vmax.f32 %v2251, %v2252
    %v2254 = vsel %vm579, %v2098, -inf
    %v2255 = vmax.f32 %v2253, %v2254
    %v2256 = vrot.slane %v2255, 4
    %v2257 = vmax.f32 %v2255, %v2256
    %v2258 = vrot.slane %v2257, 2
    %v2259 = vmax.f32 %v2257, %v2258
    %v2260 = vrot.slane %v2259, 1
    %v2261 = vmax.f32 %v2259, %v2260
    %v2262 = vsel %vm579, %v2099, -inf
    %v2263 = vsel %vm579, %v2100, -inf
    %v2264 = vmax.f32 %v2262, %v2263
    %v2265 = vsel %vm579, %v2101, -inf
    %v2266 = vmax.f32 %v2264, %v2265
    %v2267 = vsel %vm579, %v2102, -inf
    %v2268 = vmax.f32 %v2266, %v2267
    %v2269 = vrot.slane %v2268, 4
    %v2270 = vmax.f32 %v2268, %v2269
    %v2271 = vrot.slane %v2270, 2
    %v2272 = vmax.f32 %v2270, %v2271
    %v2273 = vrot.slane %v2272, 1
    %v2274 = vmax.f32 %v2272, %v2273
    %v2275 = vsel %vm579, %v2103, -inf
    %v2276 = vsel %vm579, %v2104, -inf
    %v2277 = vmax.f32 %v2275, %v2276
    %v2278 = vsel %vm579, %v2105, -inf
    %v2279 = vmax.f32 %v2277, %v2278
    %v2280 = vsel %vm579, %v2106, -inf
    %v2281 = vmax.f32 %v2279, %v2280
    %v2282 = vrot.slane %v2281, 4
    %v2283 = vmax.f32 %v2281, %v2282
    %v2284 = vrot.slane %v2283, 2
    %v2285 = vmax.f32 %v2283, %v2284
    %v2286 = vrot.slane %v2285, 1
    %v2287 = vmax.f32 %v2285, %v2286
    %v2288 = vsel %vm579, %v2107, -inf
    %v2289 = vsel %vm579, %v2108, -inf
    %v2290 = vmax.f32 %v2288, %v2289
    %v2291 = vsel %vm579, %v2109, -inf
    %v2292 = vmax.f32 %v2290, %v2291
    %v2293 = vsel %vm579, %v2110, -inf
    %v2294 = vmax.f32 %v2292, %v2293
    %v2295 = vrot.slane %v2294, 4
    %v2296 = vmax.f32 %v2294, %v2295
    %v2297 = vrot.slane %v2296, 2
    %v2298 = vmax.f32 %v2296, %v2297
    %v2299 = vrot.slane %v2298, 1
    %v2300 = vmax.f32 %v2298, %v2299
    %v2301 = vsel %vm579, %v2111, -inf
    %v2302 = vsel %vm579, %v2112, -inf
    %v2303 = vmax.f32 %v2301, %v2302
    %v2304 = vsel %vm579, %v2113, -inf
    %v2305 = vmax.f32 %v2303, %v2304
    %v2306 = vsel %vm579, %v2114, -inf
    %v2307 = vmax.f32 %v2305, %v2306
    %v2308 = vrot.slane %v2307, 4
    %v2309 = vmax.f32 %v2307, %v2308
    %v2310 = vrot.slane %v2309, 2
    %v2311 = vmax.f32 %v2309, %v2310
    %v2312 = vrot.slane %v2311, 1
    %v2313 = vmax.f32 %v2311, %v2312
    %v2314 = vsel %vm579, %v2115, -inf
    %v2315 = vsel %vm579, %v2116, -inf
    %v2316 = vmax.f32 %v2314, %v2315
    %v2317 = vsel %vm579, %v2117, -inf
    %v2318 = vmax.f32 %v2316, %v2317
    %v2319 = vsel %vm579, %v2118, -inf
    %v2320 = vmax.f32 %v2318, %v2319
    %v2321 = vrot.slane %v2320, 4
    %v2322 = vmax.f32 %v2320, %v2321
    %v2323 = vrot.slane %v2322, 2
    %v2324 = vmax.f32 %v2322, %v2323
    %v2325 = vrot.slane %v2324, 1
    %v2326 = vmax.f32 %v2324, %v2325
    %vm2343 = vcmask 1041409
    %v2344 = vsel %vm2343, %v2144, %v2131
    %vm2345 = vcmask 1042434
    %v2346 = vsel %vm2345, %v2157, %v2344
    %vm2347 = vcmask 1043459
    %v2348 = vsel %vm2347, %v2170, %v2346
    %vm2349 = vcmask 1044484
    %v2350 = vsel %vm2349, %v2183, %v2348
    %vm2351 = vcmask 1045509
    %v2352 = vsel %vm2351, %v2196, %v2350
    %vm2353 = vcmask 1046534
    %v2354 = vsel %vm2353, %v2209, %v2352
    %vm2355 = vcmask 1047559
    %v2356 = vsel %vm2355, %v2222, %v2354
    %v2357 = vsel %vm2343, %v2248, %v2235
    %v2358 = vsel %vm2345, %v2261, %v2357
    %v2359 = vsel %vm2347, %v2274, %v2358
    %v2360 = vsel %vm2349, %v2287, %v2359
    %v2361 = vsel %vm2351, %v2300, %v2360
    %v2362 = vsel %vm2353, %v2313, %v2361
    %v2363 = vsel %vm2355, %v2326, %v2362
    %2366 = vxpose.xlu0.b32.start [1/16] %v2356, 128
    %2367 = vxpose.xlu0.b32.cont [2/16] %v2363, 128
    %2368 = vxpose.xlu0.b32.cont [3/16] 0.0, 128
    %2369 = vxpose.xlu0.b32.cont [4/16] 0.0, 128
    %2370 = vxpose.xlu0.b32.cont [5/16] 0.0, 128
    %2371 = vxpose.xlu0.b32.cont [6/16] 0.0, 128
    %2372 = vxpose.xlu0.b32.cont [7/16] 0.0, 128
    %2373 = vxpose.xlu0.b32.cont [8/16] 0.0, 128
    %2374 = vxpose.xlu0.b32.cont [9/16] 0.0, 128
    %2375 = vxpose.xlu0.b32.cont [10/16] 0.0, 128
    %2376 = vxpose.xlu0.b32.cont [11/16] 0.0, 128
    %2377 = vxpose.xlu0.b32.cont [12/16] 0.0, 128
    %2378 = vxpose.xlu0.b32.cont [13/16] 0.0, 128
    %2379 = vxpose.xlu0.b32.cont [14/16] 0.0, 128
    %2380 = vxpose.xlu0.b32.cont [15/16] 0.0, 128
    %2381 = vxpose.xlu0.b32.end [16/16] 0.0, 128
    %v2382 = vpop.trf.xlu0
    %v2383 = vpop.trf.xlu0
    %v2384 = vpop.trf.xlu0
    %v2385 = vpop.trf.xlu0
    %v2386 = vpop.trf.xlu0
    %v2387 = vpop.trf.xlu0
    %v2388 = vpop.trf.xlu0
    %v2389 = vpop.trf.xlu0
    %v2390 = vpop.trf.xlu0
    %v2391 = vpop.trf.xlu0
    %v2392 = vpop.trf.xlu0
    %v2393 = vpop.trf.xlu0
    %v2394 = vpop.trf.xlu0
    %v2395 = vpop.trf.xlu0
    %v2396 = vpop.trf.xlu0
    %v2397 = vpop.trf.xlu0
    %vm2398 = vcmask 130048
    %2399 = vst.msk [vmem:[%s5] sm:$0xff] %vm2398, %v2382
    %2400 = vst.msk [vmem:[%s5 + $0x8] sm:$0xff] %vm2398, %v2383
    %2401 = vst.msk [vmem:[%s5 + $0x10] sm:$0xff] %vm2398, %v2384
    %2402 = vst.msk [vmem:[%s5 + $0x18] sm:$0xff] %vm2398, %v2385
    // Predicated region
    $region38: #{tpu_custom_call.1} parent=1 // pred_check
      _
    $region39: #{tpu_custom_call.1} parent=1 // pred_check_branch
      %2404 = sbr.rel (0) target = $region41
    $region40: #{tpu_custom_call.1} parent=1 // pred_region
      _
    $region41: #{tpu_custom_call.1} parent=1 // pred_fallthru
      _
    // Predicated region
    $region42: #{tpu_custom_call.1} parent=1 // pred_check
      _
    $region43: #{tpu_custom_call.1} parent=1 // pred_check_branch
      %2406 = sbr.rel (0) target = $region45
    $region44: #{tpu_custom_call.1} parent=1 // pred_region
      _
    $region45: #{tpu_custom_call.1} parent=1 // pred_fallthru
      _
    %2407 = vsyncpa [#allocation3], 1
    %2408 = vsyncpa [#allocation5], 1
    %2409 = vsyncpa [#allocation8], 1

</llo_original>
